<compile_context>
chip_gen: v5e
topology: v5e:2x2
jax: 0.10.0
libtpu: 0.0.40
codegen_flags: <defaults>
</compile_context>

<pallas_src>
import math

import jax
import jax.numpy as jnp
from jax.experimental import pallas as pl
from jax.experimental.pallas import tpu as pltpu


def _make_kernel(c_in, c_out):
    """Kernel body for one (batch, input-row-block) grid step.

    Refs:
      x_ref : (1, C_in, TH*W)          input row block, lane-dense (VMEM)
      w_ref : (C_out, C_in) f32        1x1 conv weights (SMEM, scalar reads)
      u_ref : (TH*W, TH_out*W_out) f32 fused 0/1 nearest-replication matrix
      o_ref : (1, C_out, TH_out*W_out) output block, lane-dense
      y_ref : (C_out, TH*W) f32        conv accumulator scratch (VMEM)
    """

    def kernel(x_ref, w_ref, u_ref, o_ref, y_ref):
        x = x_ref[0].astype(jnp.float32)                  # (C_in, TH*W)
        # 1x1 conv: unrolled scalar-broadcast FMAs on the VPU.
        # TODO(synk): switch to an MXU matmul if C_in/C_out grow large.
        for co in range(c_out):
            acc = x[0:1, :] * w_ref[co, 0]
            for ci in range(1, c_in):
                acc = acc + x[ci:ci + 1, :] * w_ref[co, ci]   # (1, TH*W) f32
            y_ref[co:co + 1, :] = acc
        # Fused H+W nearest replication: one 0/1 MXU matmul (exact selection).
        o_ref[0] = jnp.dot(y_ref[...], u_ref[...],
                           preferred_element_type=jnp.float32).astype(o_ref.dtype)

    return kernel


def _pick_block_h(h, w, c_in, c_out, s, w_out, itemsize, budget=6 << 20):
    """Largest TH dividing H with TH*W a multiple of 128 (or TH == H) that keeps
    the resident U matrix + double-buffered in/out blocks + scratch under a
    modest VMEM budget (well inside v7x's 64 MiB)."""
    cands = [t for t in range(1, h + 1)
             if h % t == 0 and ((t * w) % 128 == 0 or t == h)]

    def footprint(t):
        t_out = t * s
        u_bytes = (t * w) * (t_out * w_out) * 4                       # resident U (f32)
        io_bytes = 2 * (c_in * t * w + c_out * t_out * w_out) * itemsize
        scr_bytes = c_out * t * w * 4
        return u_bytes + io_bytes + scr_bytes

    fit = [t for t in cands if footprint(t) <= budget]
    return max(fit) if fit else min(cands)


def fuse_sampling_2d(x, weight, scale_factor):
    """x: (N, C_in, H, W) NCHW; weight: (C_out, C_in, 1, 1). Returns NCHW output."""
    n, c_in, h, w = x.shape
    c_out = weight.shape[0]
    h_out = int(math.floor(h * scale_factor))
    w_out = int(math.floor(w * scale_factor))

    sf = float(scale_factor)
    s_is_int = sf >= 1.0 and sf.is_integer()
    if s_is_int:
        s = int(round(sf))
        th = _pick_block_h(h, w, c_in, c_out, s, w_out, x.dtype.itemsize)
        th_out = th * s
    else:
        # TODO(synk): non-integer scales keep H untiled (one block per batch);
        # tile H_out with a bounded source window if huge images become VMEM-bound.
        th, th_out = h, h_out
    n_hblk = h // th
    thw, tho_wo = th * w, th_out * w_out

    # Fused 0/1 nearest-replication matrix for one row block (exact int math):
    #   src_row = (dst_row * TH) // TH_out   (== dst_row // s for integer s)
    #   src_col = (dst_col * W ) // W_out
    sh = (jnp.arange(th_out, dtype=jnp.int32) * th) // th_out
    sw = (jnp.arange(w_out, dtype=jnp.int32) * w) // w_out
    src_flat = (sh[:, None] * w + sw[None, :]).reshape(-1)            # (THo*Wo,)
    u = (jnp.arange(thw, dtype=jnp.int32)[:, None] == src_flat[None, :]
         ).astype(jnp.float32)                                         # (THW, THo*Wo)

    w2 = weight[:, :, 0, 0].astype(jnp.float32)                        # (C_out, C_in)
    x_flat = x.reshape(n, c_in, h * w)                                  # trailing-dim reshape: free

    out_flat = pl.pallas_call(
        _make_kernel(c_in, c_out),
        out_shape=jax.ShapeDtypeStruct((n, c_out, h_out * w_out), x.dtype),
        grid=(n, n_hblk),
        in_specs=[
            pl.BlockSpec((1, c_in, thw), lambda b, i: (b, 0, i)),       # input rows
            pl.BlockSpec(memory_space=pltpu.MemorySpace.SMEM),          # 1x1 weights
            pl.BlockSpec((thw, tho_wo), lambda b, i: (0, 0)),           # resident U
        ],
        out_specs=pl.BlockSpec((1, c_out, tho_wo), lambda b, i: (b, 0, i)),
        scratch_shapes=[pltpu.VMEM((c_out, thw), jnp.float32)],
        compiler_params=pltpu.CompilerParams(
            dimension_semantics=("parallel", "parallel")),
    )(x_flat, w2, u)

    return out_flat.reshape(n, c_out, h_out, w_out)


def _reference(x, weight, scale_factor):
    # Pure-JAX reference: nearest upsample (same exact-int index rule) + 1x1 conv.
    _, _, h, w = x.shape
    h_out = int(math.floor(h * scale_factor))
    w_out = int(math.floor(w * scale_factor))
    sh = (jnp.arange(h_out) * h) // h_out
    sw = (jnp.arange(w_out) * w) // w_out
    x_up = x[:, :, sh, :][:, :, :, sw]
    return jnp.einsum("oc,nchw->nohw", weight[:, :, 0, 0], x_up,
                      precision=jax.lax.Precision.HIGHEST)


if __name__ == "__main__":
    # module config: _FuseSampling2d(in_channels=4, out_channels=8, scale_factor=2)
    N, C_in, H, W = 2, 4, 16, 16
    C_out = 8
    scale_factor = 2

    key = jax.random.PRNGKey(0)
    kx, kw = jax.random.split(key)
    x = jax.random.normal(kx, (N, C_in, H, W), dtype=jnp.float32)
    # deterministic Conv2d(4, 8, 1, bias=False)-like weight
    bound = 1.0 / math.sqrt(C_in)
    weight = jax.random.uniform(kw, (C_out, C_in, 1, 1), dtype=jnp.float32,
                                minval=-bound, maxval=bound)

    out = jax.block_until_ready(fuse_sampling_2d(x, weight, scale_factor))

    ref = _reference(x, weight, scale_factor)
    assert out.shape == (N, C_out, H * scale_factor, W * scale_factor), out.shape
    assert jnp.allclose(out, ref, rtol=1e-3, atol=1e-3), "mismatch vs reference"

    print("KERNEL_OK")
</pallas_src>

<mosaic_0001>
module attributes {stable_mosaic.version = 11 : i64} {
  func.func @kernel(%arg0: i32, %arg1: i32, %arg2: memref<1x4x256xf32, #tpu.memory_space<vmem>>, %arg3: memref<8x4xf32, #tpu.memory_space<smem>>, %arg4: memref<256x1024xf32, #tpu.memory_space<vmem>>, %arg5: memref<1x8x1024xf32, #tpu.memory_space<vmem>>, %arg6: memref<8x256xf32, #tpu.memory_space<vmem>>) attributes {dimension_semantics = [#tpu.dimension_semantics<parallel>, #tpu.dimension_semantics<parallel>], iteration_bounds = array<i64: 2, 1>, scalar_prefetch = 0 : i64, scratch_operands = 1 : i64, tpu.core_type = #tpu.core_type<tc>, window_params = [{transform_indices = @transform_0, window_bounds = array<i64: 1, 4, 256>}, {transform_indices = @transform_1, window_bounds = array<i64: 8, 4>}, {pipeline_mode = #tpu.pipeline_mode<synchronous>, transform_indices = @transform_2, window_bounds = array<i64: 256, 1024>}, {transform_indices = @transform_3, window_bounds = array<i64: 1, 8, 1024>}]} {
    %c0 = arith.constant 0 : index
    %c0_0 = arith.constant 0 : index
    %c0_1 = arith.constant 0 : index
    %0 = vector.load %arg2[%c0, %c0_0, %c0_1] : memref<1x4x256xf32, #tpu.memory_space<vmem>>, vector<1x4x256xf32>
    %1 = vector.shape_cast %0 : vector<1x4x256xf32> to vector<4x256xf32>
    %2 = vector.extract_strided_slice %1 {offsets = [0, 0], sizes = [1, 256], strides = [1, 1]} : vector<4x256xf32> to vector<1x256xf32>
    %c0_2 = arith.constant 0 : index
    %c0_3 = arith.constant 0 : index
    %3 = memref.load %arg3[%c0_2, %c0_3] : memref<8x4xf32, #tpu.memory_space<smem>>
    %4 = vector.broadcast %3 : f32 to vector<1x256xf32>
    %5 = arith.mulf %2, %4 : vector<1x256xf32>
    %6 = vector.extract_strided_slice %1 {offsets = [1, 0], sizes = [1, 256], strides = [1, 1]} : vector<4x256xf32> to vector<1x256xf32>
    %c0_4 = arith.constant 0 : index
    %c1 = arith.constant 1 : index
    %7 = memref.load %arg3[%c0_4, %c1] : memref<8x4xf32, #tpu.memory_space<smem>>
    %8 = vector.broadcast %7 : f32 to vector<1x256xf32>
    %9 = arith.mulf %6, %8 : vector<1x256xf32>
    %10 = arith.addf %5, %9 : vector<1x256xf32>
    %11 = vector.extract_strided_slice %1 {offsets = [2, 0], sizes = [1, 256], strides = [1, 1]} : vector<4x256xf32> to vector<1x256xf32>
    %c0_5 = arith.constant 0 : index
    %c2 = arith.constant 2 : index
    %12 = memref.load %arg3[%c0_5, %c2] : memref<8x4xf32, #tpu.memory_space<smem>>
    %13 = vector.broadcast %12 : f32 to vector<1x256xf32>
    %14 = arith.mulf %11, %13 : vector<1x256xf32>
    %15 = arith.addf %10, %14 : vector<1x256xf32>
    %16 = vector.extract_strided_slice %1 {offsets = [3, 0], sizes = [1, 256], strides = [1, 1]} : vector<4x256xf32> to vector<1x256xf32>
    %c0_6 = arith.constant 0 : index
    %c3 = arith.constant 3 : index
    %17 = memref.load %arg3[%c0_6, %c3] : memref<8x4xf32, #tpu.memory_space<smem>>
    %18 = vector.broadcast %17 : f32 to vector<1x256xf32>
    %19 = arith.mulf %16, %18 : vector<1x256xf32>
    %20 = arith.addf %15, %19 : vector<1x256xf32>
    %c0_7 = arith.constant 0 : index
    %c0_8 = arith.constant 0 : index
    %21 = vector.load %arg6[%c0_7, %c0_8] : memref<8x256xf32, #tpu.memory_space<vmem>>, vector<1x256xf32>
    tpu.vector_store %arg6[%c0_7, %c0_8], %20 {strides = array<i32>} : memref<8x256xf32, #tpu.memory_space<vmem>>, vector<1x256xf32>,
    %22 = vector.extract_strided_slice %1 {offsets = [0, 0], sizes = [1, 256], strides = [1, 1]} : vector<4x256xf32> to vector<1x256xf32>
    %c1_9 = arith.constant 1 : index
    %c0_10 = arith.constant 0 : index
    %23 = memref.load %arg3[%c1_9, %c0_10] : memref<8x4xf32, #tpu.memory_space<smem>>
    %24 = vector.broadcast %23 : f32 to vector<1x256xf32>
    %25 = arith.mulf %22, %24 : vector<1x256xf32>
    %26 = vector.extract_strided_slice %1 {offsets = [1, 0], sizes = [1, 256], strides = [1, 1]} : vector<4x256xf32> to vector<1x256xf32>
    %c1_11 = arith.constant 1 : index
    %c1_12 = arith.constant 1 : index
    %27 = memref.load %arg3[%c1_11, %c1_12] : memref<8x4xf32, #tpu.memory_space<smem>>
    %28 = vector.broadcast %27 : f32 to vector<1x256xf32>
    %29 = arith.mulf %26, %28 : vector<1x256xf32>
    %30 = arith.addf %25, %29 : vector<1x256xf32>
    %31 = vector.extract_strided_slice %1 {offsets = [2, 0], sizes = [1, 256], strides = [1, 1]} : vector<4x256xf32> to vector<1x256xf32>
    %c1_13 = arith.constant 1 : index
    %c2_14 = arith.constant 2 : index
    %32 = memref.load %arg3[%c1_13, %c2_14] : memref<8x4xf32, #tpu.memory_space<smem>>
    %33 = vector.broadcast %32 : f32 to vector<1x256xf32>
    %34 = arith.mulf %31, %33 : vector<1x256xf32>
    %35 = arith.addf %30, %34 : vector<1x256xf32>
    %36 = vector.extract_strided_slice %1 {offsets = [3, 0], sizes = [1, 256], strides = [1, 1]} : vector<4x256xf32> to vector<1x256xf32>
    %c1_15 = arith.constant 1 : index
    %c3_16 = arith.constant 3 : index
    %37 = memref.load %arg3[%c1_15, %c3_16] : memref<8x4xf32, #tpu.memory_space<smem>>
    %38 = vector.broadcast %37 : f32 to vector<1x256xf32>
    %39 = arith.mulf %36, %38 : vector<1x256xf32>
    %40 = arith.addf %35, %39 : vector<1x256xf32>
    %c1_17 = arith.constant 1 : index
    %c0_18 = arith.constant 0 : index
    %41 = vector.load %arg6[%c1_17, %c0_18] : memref<8x256xf32, #tpu.memory_space<vmem>>, vector<1x256xf32>
    tpu.vector_store %arg6[%c1_17, %c0_18], %40 {strides = array<i32>} : memref<8x256xf32, #tpu.memory_space<vmem>>, vector<1x256xf32>,
    %42 = vector.extract_strided_slice %1 {offsets = [0, 0], sizes = [1, 256], strides = [1, 1]} : vector<4x256xf32> to vector<1x256xf32>
    %c2_19 = arith.constant 2 : index
    %c0_20 = arith.constant 0 : index
    %43 = memref.load %arg3[%c2_19, %c0_20] : memref<8x4xf32, #tpu.memory_space<smem>>
    %44 = vector.broadcast %43 : f32 to vector<1x256xf32>
    %45 = arith.mulf %42, %44 : vector<1x256xf32>
    %46 = vector.extract_strided_slice %1 {offsets = [1, 0], sizes = [1, 256], strides = [1, 1]} : vector<4x256xf32> to vector<1x256xf32>
    %c2_21 = arith.constant 2 : index
    %c1_22 = arith.constant 1 : index
    %47 = memref.load %arg3[%c2_21, %c1_22] : memref<8x4xf32, #tpu.memory_space<smem>>
    %48 = vector.broadcast %47 : f32 to vector<1x256xf32>
    %49 = arith.mulf %46, %48 : vector<1x256xf32>
    %50 = arith.addf %45, %49 : vector<1x256xf32>
    %51 = vector.extract_strided_slice %1 {offsets = [2, 0], sizes = [1, 256], strides = [1, 1]} : vector<4x256xf32> to vector<1x256xf32>
    %c2_23 = arith.constant 2 : index
    %c2_24 = arith.constant 2 : index
    %52 = memref.load %arg3[%c2_23, %c2_24] : memref<8x4xf32, #tpu.memory_space<smem>>
    %53 = vector.broadcast %52 : f32 to vector<1x256xf32>
    %54 = arith.mulf %51, %53 : vector<1x256xf32>
    %55 = arith.addf %50, %54 : vector<1x256xf32>
    %56 = vector.extract_strided_slice %1 {offsets = [3, 0], sizes = [1, 256], strides = [1, 1]} : vector<4x256xf32> to vector<1x256xf32>
    %c2_25 = arith.constant 2 : index
    %c3_26 = arith.constant 3 : index
    %57 = memref.load %arg3[%c2_25, %c3_26] : memref<8x4xf32, #tpu.memory_space<smem>>
    %58 = vector.broadcast %57 : f32 to vector<1x256xf32>
    %59 = arith.mulf %56, %58 : vector<1x256xf32>
    %60 = arith.addf %55, %59 : vector<1x256xf32>
    %c2_27 = arith.constant 2 : index
    %c0_28 = arith.constant 0 : index
    %61 = vector.load %arg6[%c2_27, %c0_28] : memref<8x256xf32, #tpu.memory_space<vmem>>, vector<1x256xf32>
    tpu.vector_store %arg6[%c2_27, %c0_28], %60 {strides = array<i32>} : memref<8x256xf32, #tpu.memory_space<vmem>>, vector<1x256xf32>,
    %62 = vector.extract_strided_slice %1 {offsets = [0, 0], sizes = [1, 256], strides = [1, 1]} : vector<4x256xf32> to vector<1x256xf32>
    %c3_29 = arith.constant 3 : index
    %c0_30 = arith.constant 0 : index
    %63 = memref.load %arg3[%c3_29, %c0_30] : memref<8x4xf32, #tpu.memory_space<smem>>
    %64 = vector.broadcast %63 : f32 to vector<1x256xf32>
    %65 = arith.mulf %62, %64 : vector<1x256xf32>
    %66 = vector.extract_strided_slice %1 {offsets = [1, 0], sizes = [1, 256], strides = [1, 1]} : vector<4x256xf32> to vector<1x256xf32>
    %c3_31 = arith.constant 3 : index
    %c1_32 = arith.constant 1 : index
    %67 = memref.load %arg3[%c3_31, %c1_32] : memref<8x4xf32, #tpu.memory_space<smem>>
    %68 = vector.broadcast %67 : f32 to vector<1x256xf32>
    %69 = arith.mulf %66, %68 : vector<1x256xf32>
    %70 = arith.addf %65, %69 : vector<1x256xf32>
    %71 = vector.extract_strided_slice %1 {offsets = [2, 0], sizes = [1, 256], strides = [1, 1]} : vector<4x256xf32> to vector<1x256xf32>
    %c3_33 = arith.constant 3 : index
    %c2_34 = arith.constant 2 : index
    %72 = memref.load %arg3[%c3_33, %c2_34] : memref<8x4xf32, #tpu.memory_space<smem>>
    %73 = vector.broadcast %72 : f32 to vector<1x256xf32>
    %74 = arith.mulf %71, %73 : vector<1x256xf32>
    %75 = arith.addf %70, %74 : vector<1x256xf32>
    %76 = vector.extract_strided_slice %1 {offsets = [3, 0], sizes = [1, 256], strides = [1, 1]} : vector<4x256xf32> to vector<1x256xf32>
    %c3_35 = arith.constant 3 : index
    %c3_36 = arith.constant 3 : index
    %77 = memref.load %arg3[%c3_35, %c3_36] : memref<8x4xf32, #tpu.memory_space<smem>>
    %78 = vector.broadcast %77 : f32 to vector<1x256xf32>
    %79 = arith.mulf %76, %78 : vector<1x256xf32>
    %80 = arith.addf %75, %79 : vector<1x256xf32>
    %c3_37 = arith.constant 3 : index
    %c0_38 = arith.constant 0 : index
    %81 = vector.load %arg6[%c3_37, %c0_38] : memref<8x256xf32, #tpu.memory_space<vmem>>, vector<1x256xf32>
    tpu.vector_store %arg6[%c3_37, %c0_38], %80 {strides = array<i32>} : memref<8x256xf32, #tpu.memory_space<vmem>>, vector<1x256xf32>,
    %82 = vector.extract_strided_slice %1 {offsets = [0, 0], sizes = [1, 256], strides = [1, 1]} : vector<4x256xf32> to vector<1x256xf32>
    %c4 = arith.constant 4 : index
    %c0_39 = arith.constant 0 : index
    %83 = memref.load %arg3[%c4, %c0_39] : memref<8x4xf32, #tpu.memory_space<smem>>
    %84 = vector.broadcast %83 : f32 to vector<1x256xf32>
    %85 = arith.mulf %82, %84 : vector<1x256xf32>
    %86 = vector.extract_strided_slice %1 {offsets = [1, 0], sizes = [1, 256], strides = [1, 1]} : vector<4x256xf32> to vector<1x256xf32>
    %c4_40 = arith.constant 4 : index
    %c1_41 = arith.constant 1 : index
    %87 = memref.load %arg3[%c4_40, %c1_41] : memref<8x4xf32, #tpu.memory_space<smem>>
    %88 = vector.broadcast %87 : f32 to vector<1x256xf32>
    %89 = arith.mulf %86, %88 : vector<1x256xf32>
    %90 = arith.addf %85, %89 : vector<1x256xf32>
    %91 = vector.extract_strided_slice %1 {offsets = [2, 0], sizes = [1, 256], strides = [1, 1]} : vector<4x256xf32> to vector<1x256xf32>
    %c4_42 = arith.constant 4 : index
    %c2_43 = arith.constant 2 : index
    %92 = memref.load %arg3[%c4_42, %c2_43] : memref<8x4xf32, #tpu.memory_space<smem>>
    %93 = vector.broadcast %92 : f32 to vector<1x256xf32>
    %94 = arith.mulf %91, %93 : vector<1x256xf32>
    %95 = arith.addf %90, %94 : vector<1x256xf32>
    %96 = vector.extract_strided_slice %1 {offsets = [3, 0], sizes = [1, 256], strides = [1, 1]} : vector<4x256xf32> to vector<1x256xf32>
    %c4_44 = arith.constant 4 : index
    %c3_45 = arith.constant 3 : index
    %97 = memref.load %arg3[%c4_44, %c3_45] : memref<8x4xf32, #tpu.memory_space<smem>>
    %98 = vector.broadcast %97 : f32 to vector<1x256xf32>
    %99 = arith.mulf %96, %98 : vector<1x256xf32>
    %100 = arith.addf %95, %99 : vector<1x256xf32>
    %c4_46 = arith.constant 4 : index
    %c0_47 = arith.constant 0 : index
    %101 = vector.load %arg6[%c4_46, %c0_47] : memref<8x256xf32, #tpu.memory_space<vmem>>, vector<1x256xf32>
    tpu.vector_store %arg6[%c4_46, %c0_47], %100 {strides = array<i32>} : memref<8x256xf32, #tpu.memory_space<vmem>>, vector<1x256xf32>,
    %102 = vector.extract_strided_slice %1 {offsets = [0, 0], sizes = [1, 256], strides = [1, 1]} : vector<4x256xf32> to vector<1x256xf32>
    %c5 = arith.constant 5 : index
    %c0_48 = arith.constant 0 : index
    %103 = memref.load %arg3[%c5, %c0_48] : memref<8x4xf32, #tpu.memory_space<smem>>
    %104 = vector.broadcast %103 : f32 to vector<1x256xf32>
    %105 = arith.mulf %102, %104 : vector<1x256xf32>
    %106 = vector.extract_strided_slice %1 {offsets = [1, 0], sizes = [1, 256], strides = [1, 1]} : vector<4x256xf32> to vector<1x256xf32>
    %c5_49 = arith.constant 5 : index
    %c1_50 = arith.constant 1 : index
    %107 = memref.load %arg3[%c5_49, %c1_50] : memref<8x4xf32, #tpu.memory_space<smem>>
    %108 = vector.broadcast %107 : f32 to vector<1x256xf32>
    %109 = arith.mulf %106, %108 : vector<1x256xf32>
    %110 = arith.addf %105, %109 : vector<1x256xf32>
    %111 = vector.extract_strided_slice %1 {offsets = [2, 0], sizes = [1, 256], strides = [1, 1]} : vector<4x256xf32> to vector<1x256xf32>
    %c5_51 = arith.constant 5 : index
    %c2_52 = arith.constant 2 : index
    %112 = memref.load %arg3[%c5_51, %c2_52] : memref<8x4xf32, #tpu.memory_space<smem>>
    %113 = vector.broadcast %112 : f32 to vector<1x256xf32>
    %114 = arith.mulf %111, %113 : vector<1x256xf32>
    %115 = arith.addf %110, %114 : vector<1x256xf32>
    %116 = vector.extract_strided_slice %1 {offsets = [3, 0], sizes = [1, 256], strides = [1, 1]} : vector<4x256xf32> to vector<1x256xf32>
    %c5_53 = arith.constant 5 : index
    %c3_54 = arith.constant 3 : index
    %117 = memref.load %arg3[%c5_53, %c3_54] : memref<8x4xf32, #tpu.memory_space<smem>>
    %118 = vector.broadcast %117 : f32 to vector<1x256xf32>
    %119 = arith.mulf %116, %118 : vector<1x256xf32>
    %120 = arith.addf %115, %119 : vector<1x256xf32>
    %c5_55 = arith.constant 5 : index
    %c0_56 = arith.constant 0 : index
    %121 = vector.load %arg6[%c5_55, %c0_56] : memref<8x256xf32, #tpu.memory_space<vmem>>, vector<1x256xf32>
    tpu.vector_store %arg6[%c5_55, %c0_56], %120 {strides = array<i32>} : memref<8x256xf32, #tpu.memory_space<vmem>>, vector<1x256xf32>,
    %122 = vector.extract_strided_slice %1 {offsets = [0, 0], sizes = [1, 256], strides = [1, 1]} : vector<4x256xf32> to vector<1x256xf32>
    %c6 = arith.constant 6 : index
    %c0_57 = arith.constant 0 : index
    %123 = memref.load %arg3[%c6, %c0_57] : memref<8x4xf32, #tpu.memory_space<smem>>
    %124 = vector.broadcast %123 : f32 to vector<1x256xf32>
    %125 = arith.mulf %122, %124 : vector<1x256xf32>
    %126 = vector.extract_strided_slice %1 {offsets = [1, 0], sizes = [1, 256], strides = [1, 1]} : vector<4x256xf32> to vector<1x256xf32>
    %c6_58 = arith.constant 6 : index
    %c1_59 = arith.constant 1 : index
    %127 = memref.load %arg3[%c6_58, %c1_59] : memref<8x4xf32, #tpu.memory_space<smem>>
    %128 = vector.broadcast %127 : f32 to vector<1x256xf32>
    %129 = arith.mulf %126, %128 : vector<1x256xf32>
    %130 = arith.addf %125, %129 : vector<1x256xf32>
    %131 = vector.extract_strided_slice %1 {offsets = [2, 0], sizes = [1, 256], strides = [1, 1]} : vector<4x256xf32> to vector<1x256xf32>
    %c6_60 = arith.constant 6 : index
    %c2_61 = arith.constant 2 : index
    %132 = memref.load %arg3[%c6_60, %c2_61] : memref<8x4xf32, #tpu.memory_space<smem>>
    %133 = vector.broadcast %132 : f32 to vector<1x256xf32>
    %134 = arith.mulf %131, %133 : vector<1x256xf32>
    %135 = arith.addf %130, %134 : vector<1x256xf32>
    %136 = vector.extract_strided_slice %1 {offsets = [3, 0], sizes = [1, 256], strides = [1, 1]} : vector<4x256xf32> to vector<1x256xf32>
    %c6_62 = arith.constant 6 : index
    %c3_63 = arith.constant 3 : index
    %137 = memref.load %arg3[%c6_62, %c3_63] : memref<8x4xf32, #tpu.memory_space<smem>>
    %138 = vector.broadcast %137 : f32 to vector<1x256xf32>
    %139 = arith.mulf %136, %138 : vector<1x256xf32>
    %140 = arith.addf %135, %139 : vector<1x256xf32>
    %c6_64 = arith.constant 6 : index
    %c0_65 = arith.constant 0 : index
    %141 = vector.load %arg6[%c6_64, %c0_65] : memref<8x256xf32, #tpu.memory_space<vmem>>, vector<1x256xf32>
    tpu.vector_store %arg6[%c6_64, %c0_65], %140 {strides = array<i32>} : memref<8x256xf32, #tpu.memory_space<vmem>>, vector<1x256xf32>,
    %142 = vector.extract_strided_slice %1 {offsets = [0, 0], sizes = [1, 256], strides = [1, 1]} : vector<4x256xf32> to vector<1x256xf32>
    %c7 = arith.constant 7 : index
    %c0_66 = arith.constant 0 : index
    %143 = memref.load %arg3[%c7, %c0_66] : memref<8x4xf32, #tpu.memory_space<smem>>
    %144 = vector.broadcast %143 : f32 to vector<1x256xf32>
    %145 = arith.mulf %142, %144 : vector<1x256xf32>
    %146 = vector.extract_strided_slice %1 {offsets = [1, 0], sizes = [1, 256], strides = [1, 1]} : vector<4x256xf32> to vector<1x256xf32>
    %c7_67 = arith.constant 7 : index
    %c1_68 = arith.constant 1 : index
    %147 = memref.load %arg3[%c7_67, %c1_68] : memref<8x4xf32, #tpu.memory_space<smem>>
    %148 = vector.broadcast %147 : f32 to vector<1x256xf32>
    %149 = arith.mulf %146, %148 : vector<1x256xf32>
    %150 = arith.addf %145, %149 : vector<1x256xf32>
    %151 = vector.extract_strided_slice %1 {offsets = [2, 0], sizes = [1, 256], strides = [1, 1]} : vector<4x256xf32> to vector<1x256xf32>
    %c7_69 = arith.constant 7 : index
    %c2_70 = arith.constant 2 : index
    %152 = memref.load %arg3[%c7_69, %c2_70] : memref<8x4xf32, #tpu.memory_space<smem>>
    %153 = vector.broadcast %152 : f32 to vector<1x256xf32>
    %154 = arith.mulf %151, %153 : vector<1x256xf32>
    %155 = arith.addf %150, %154 : vector<1x256xf32>
    %156 = vector.extract_strided_slice %1 {offsets = [3, 0], sizes = [1, 256], strides = [1, 1]} : vector<4x256xf32> to vector<1x256xf32>
    %c7_71 = arith.constant 7 : index
    %c3_72 = arith.constant 3 : index
    %157 = memref.load %arg3[%c7_71, %c3_72] : memref<8x4xf32, #tpu.memory_space<smem>>
    %158 = vector.broadcast %157 : f32 to vector<1x256xf32>
    %159 = arith.mulf %156, %158 : vector<1x256xf32>
    %160 = arith.addf %155, %159 : vector<1x256xf32>
    %c7_73 = arith.constant 7 : index
    %c0_74 = arith.constant 0 : index
    %161 = vector.load %arg6[%c7_73, %c0_74] : memref<8x256xf32, #tpu.memory_space<vmem>>, vector<1x256xf32>
    tpu.vector_store %arg6[%c7_73, %c0_74], %160 {strides = array<i32>} : memref<8x256xf32, #tpu.memory_space<vmem>>, vector<1x256xf32>,
    %c0_75 = arith.constant 0 : index
    %c0_76 = arith.constant 0 : index
    %162 = vector.load %arg6[%c0_75, %c0_76] : memref<8x256xf32, #tpu.memory_space<vmem>>, vector<8x256xf32>
    %c0_77 = arith.constant 0 : index
    %c0_78 = arith.constant 0 : index
    %163 = vector.load %arg4[%c0_77, %c0_78] : memref<256x1024xf32, #tpu.memory_space<vmem>>, vector<256x1024xf32>
    %cst = arith.constant dense<0.000000e+00> : vector<8x1024xf32>
    %164 = tpu.matmul %162, %163, %cst {dimension_numbers = #tpu.dot_dimension_numbers<[1], [0], [0], [1], [0, 0, 1, 1], [], []>} : vector<8x256xf32>, vector<256x1024xf32>, vector<8x1024xf32> -> vector<8x1024xf32>
    %c0_79 = arith.constant 0 : index
    %c0_80 = arith.constant 0 : index
    %c0_81 = arith.constant 0 : index
    %165 = vector.load %arg5[%c0_79, %c0_80, %c0_81] : memref<1x8x1024xf32, #tpu.memory_space<vmem>>, vector<1x8x1024xf32>
    %166 = vector.shape_cast %165 : vector<1x8x1024xf32> to vector<8x1024xf32>
    %167 = vector.shape_cast %164 : vector<8x1024xf32> to vector<1x8x1024xf32>
    tpu.vector_store %arg5[%c0_79, %c0_80, %c0_81], %167 {strides = array<i32>} : memref<1x8x1024xf32, #tpu.memory_space<vmem>>, vector<1x8x1024xf32>,
    return
  }
  func.func @transform_0(%arg0: i32, %arg1: i32) -> (i32, i32, i32) {
    %c0_i32 = arith.constant 0 : i32
    %c0_i32_0 = arith.constant 0 : i32
    return %arg0, %c0_i32, %arg1 : i32, i32, i32
  }
  func.func @transform_1(%arg0: i32, %arg1: i32) -> (i32, i32) {
    %c0_i32 = arith.constant 0 : i32
    %c0_i32_0 = arith.constant 0 : i32
    %c0_i32_1 = arith.constant 0 : i32
    return %c0_i32, %c0_i32_0 : i32, i32
  }
  func.func @transform_2(%arg0: i32, %arg1: i32) -> (i32, i32) {
    %c0_i32 = arith.constant 0 : i32
    %c0_i32_0 = arith.constant 0 : i32
    %c0_i32_1 = arith.constant 0 : i32
    return %c0_i32, %c0_i32_0 : i32, i32
  }
  func.func @transform_3(%arg0: i32, %arg1: i32) -> (i32, i32, i32) {
    %c0_i32 = arith.constant 0 : i32
    %c0_i32_0 = arith.constant 0 : i32
    return %arg0, %c0_i32, %arg1 : i32, i32, i32
  }
}

</mosaic_0001>

<llo_original>
// kernel: tpu_custom_call.1
$region0: #{tpu_custom_call.1}
  #allocation0 [shape = 'u32[]', space=smem, size = 0x4, offset = 0x4, fixed_abs, tag = 'smem constant byte address 0x4 - core index']
  #allocation1 [shape = 'u32[72,128]{1,0:T(1,128)}', space=vmem, size = 0x9000, scoped, tag = 'internal scratch']
  #allocation2 [shape = 'f32[8,256]{1,0:T(8,128)}', space=vmem, size = 0x2000, scoped, tag = 'scratch operand']
  %s0 = inlined_call_operand.hbm [shape: f32[2,4,256], index: 0, kind: input, shape index: {}]
  %s1 = inlined_call_operand.vmem [shape: f32[8,4], index: 1, kind: input, shape index: {}]
  %s2 = inlined_call_operand.hbm [shape: f32[256,1024], index: 2, kind: input, shape index: {}]
  %s3 = inlined_call_operand.hbm [shape: f32[2,8,1024], index: 3, kind: output, shape index: {}]
  %s4 = sld [smem:[#allocation0]]
  $region57: #{tpu_custom_call.1} parent=0
    _
  %s6 = ssub.s32 1, %s4
  %s7 = scalar_select 0, %s6, %s4
  $region1: #{tpu_custom_call.1} parent=0
    #allocation3 [shape = 'u8[8192]{0}', space=vmem, size = 0x2000, scoped, tag = 'input window, operand 0']
    #allocation4 [shape = 's32[2]{0}', space=sflag, size = 0x8, scoped, tag = 'scoped memory for tpu_custom_call.1']
    #allocation5 [shape = 's32[2]{0}', space=sflag, size = 0x8, scoped, tag = 'scoped memory for tpu_custom_call.1']
    #allocation6 [shape = 's32[2]{0}', space=sflag, size = 0x8, scoped, tag = 'scoped memory for tpu_custom_call.1']
    #allocation7 [shape = 'u8[4096]{0}', space=smem, size = 0x1000, scoped, tag = 'input window, operand 1, single buffered']
    #allocation8 [shape = 'u8[1048576]{0}', space=vmem, size = 0x100000, scoped, tag = 'input window, operand 2, single buffered']
    #allocation9 [shape = 's32[1]{0}', space=sflag, size = 0x4, scoped, tag = 'scoped memory for tpu_custom_call.1']
    #allocation10 [shape = 'u8[65536]{0}', space=vmem, size = 0x10000, scoped, tag = 'output window, operand 0']
    %8 = vsyncpa [#allocation4], 0
    %s9 = scalar_lea.sflag [#allocation4], 1
    %10 = vsyncpa %s9, 0
    %11 = vsyncpa [#allocation6], 0
    %12 = vsyncpa [#allocation9], 0
    %13 = vsyncpa [#allocation5], 0
    %s14 = scalar_lea.sflag [#allocation5], 1
    %15 = vsyncpa %s14, 0
    loop: start=0, step=1, limit=4
    $region2: #{tpu_custom_call.1} parent=1 // loop_pre_header
      _
    $region3: #{tpu_custom_call.1} parent=1 // loop_header
      %s17 = sphi 0, %s21
      %p18 = scmp.ge.s32.totalorder %s17, 4
      %s24 = sphi 0, %s36
      %s25 = sphi 0, %s32
      %s26 = sphi 0, %s24
      %s27 = sphi 0, %s25
      %s28 = sphi 0, %s26
      %s29 = sphi 0, %s27
      %s41 = sphi 0, %s43
      %s44 = sphi 0, %s41
      %s45 = sphi 0, %s44
      %s61 = sphi 0, %s45
      %s65 = sphi 0, %s65
      %s67 = sphi 0, %s65
      %s68 = sphi 0, %s67
      %s82 = sphi 0, %s68
      %s86 = sphi 0, %s86
      %s88 = sphi 0, %s86
      %s89 = sphi 0, %s88
      %s103 = sphi 0, %s89
      %s111 = sphi 0, %s113
      %s114 = sphi 0, %s111
      %s115 = sphi 0, %s114
      %s131 = sphi 0, %s115
    $region4: #{tpu_custom_call.1} parent=1 // loop_header_branch
      %20 = sbr.rel (%p18) target = $region8
    $region5: #{tpu_custom_call.1} parent=1 // loop_body
      %s22 = ssub.s32 %s17, 1
      %s23 = ssub.s32 %s17, 2
      %s30 = sadd.s32 1, %s25
      %p31 = scmp.ge.s32.totalorder %s30, 1
      %s32 = scalar_select %p31, 0, %s30
      %s33 = sadd.s32 1, %s24
      %s34 = scalar_select %p31, %s33, %s24
      %p35 = scmp.ge.s32.totalorder %s34, 2
      %s36 = scalar_select %p35, 0, %s34
      %s37 = ssub.s32 %s24, %s36
      %s38 = ssub.s32 %s25, %s32
      %s39 = sor.u32 %s37, %s38
      %p40 = scmp.eq.s32.totalorder %s39, 0
      %s42 = sadd.s32 %s41, 1
      %s43 = scalar_select %p40, %s41, %s42
      %p46 = pneg %p40
      %p47 = scmp.eq.s32.totalorder %s17, 1
      %p48 = por %p46, %p47
      %p49 = scmp.ne.s32.totalorder %s41, %s44
      %p50 = scmp.eq.s32.totalorder %s17, 0
      %p51 = por %p49, %p50
      %p52 = scmp.ne.s32.totalorder %s41, %s44
      %p53 = scmp.eq.s32.totalorder %s22, 1
      %p54 = por %p52, %p53
      %p55 = scmp.ne.s32.totalorder %s44, %s45
      %p56 = scmp.eq.s32.totalorder %s22, 0
      %p57 = por %p55, %p56
      %p58 = scmp.ne.s32.totalorder %s44, %s45
      %p59 = scmp.eq.s32.totalorder %s23, 1
      %p60 = por %p58, %p59
      %p62 = scmp.ne.s32.totalorder %s45, %s61
      %p63 = scmp.eq.s32.totalorder %s23, 0
      %p64 = por %p62, %p63
      %s66 = sadd.s32 %s65, 1
      %p69 = scmp.eq.s32.totalorder %s17, 1
      %p70 = scmp.ne.s32.totalorder %s65, %s67
      %p71 = scmp.eq.s32.totalorder %s17, 0
      %p72 = por %p70, %p71
      %p73 = scmp.ne.s32.totalorder %s65, %s67
      %p74 = scmp.eq.s32.totalorder %s22, 1
      %p75 = por %p73, %p74
      %p76 = scmp.ne.s32.totalorder %s67, %s68
      %p77 = scmp.eq.s32.totalorder %s22, 0
      %p78 = por %p76, %p77
      %p79 = scmp.ne.s32.totalorder %s67, %s68
      %p80 = scmp.eq.s32.totalorder %s23, 1
      %p81 = por %p79, %p80
      %p83 = scmp.ne.s32.totalorder %s68, %s82
      %p84 = scmp.eq.s32.totalorder %s23, 0
      %p85 = por %p83, %p84
      %s87 = sadd.s32 %s86, 1
      %p90 = scmp.eq.s32.totalorder %s17, 1
      %p91 = scmp.ne.s32.totalorder %s86, %s88
      %p92 = scmp.eq.s32.totalorder %s17, 0
      %p93 = por %p91, %p92
      %p94 = scmp.ne.s32.totalorder %s86, %s88
      %p95 = scmp.eq.s32.totalorder %s22, 1
      %p96 = por %p94, %p95
      %p97 = scmp.ne.s32.totalorder %s88, %s89
      %p98 = scmp.eq.s32.totalorder %s22, 0
      %p99 = por %p97, %p98
      %p100 = scmp.ne.s32.totalorder %s88, %s89
      %p101 = scmp.eq.s32.totalorder %s23, 1
      %p102 = por %p100, %p101
      %p104 = scmp.ne.s32.totalorder %s89, %s103
      %p105 = scmp.eq.s32.totalorder %s23, 0
      %p106 = por %p104, %p105
      %s107 = ssub.s32 %s24, %s36
      %s108 = ssub.s32 %s25, %s32
      %s109 = sor.u32 %s107, %s108
      %p110 = scmp.eq.s32.totalorder %s109, 0
      %s112 = sadd.s32 %s111, 1
      %s113 = scalar_select %p110, %s111, %s112
      %p116 = pneg %p110
      %p117 = scmp.eq.s32.totalorder %s17, 1
      %p118 = por %p116, %p117
      %p119 = scmp.ne.s32.totalorder %s111, %s114
      %p120 = scmp.eq.s32.totalorder %s17, 0
      %p121 = por %p119, %p120
      %p122 = scmp.ne.s32.totalorder %s111, %s114
      %p123 = scmp.eq.s32.totalorder %s22, 1
      %p124 = por %p122, %p123
      %p125 = scmp.ne.s32.totalorder %s114, %s115
      %p126 = scmp.eq.s32.totalorder %s22, 0
      %p127 = por %p125, %p126
      %p128 = scmp.ne.s32.totalorder %s114, %s115
      %p129 = scmp.eq.s32.totalorder %s23, 1
      %p130 = por %p128, %p129
      %p132 = scmp.ne.s32.totalorder %s115, %s131
      %p133 = scmp.eq.s32.totalorder %s23, 0
      %p134 = por %p132, %p133
      %p135 = scmp.le.s32.totalorder 1, %s17
      %p136 = scmp.lt.s32.totalorder %s17, 3
      %p137 = pnand %p135, %p136
      %p138 = pneg %p137
      // Predicated region
      $region9: #{tpu_custom_call.1} parent=5 // pred_check
        _
      $region10: #{tpu_custom_call.1} parent=5 // pred_check_branch
        %140 = sbr.rel (%p137) target = $region12
      $region11: #{tpu_custom_call.1} parent=5 // pred_region
        %s141 = ssub.s32 %s17, 1
        // Predicated region
        $region13: #{tpu_custom_call.1} parent=11 // pred_check
          %p142 = pneg %p78
        $region14: #{tpu_custom_call.1} parent=11 // pred_check_branch
          %144 = sbr.rel (%p142) target = $region16
        $region15: #{tpu_custom_call.1} parent=11 // pred_region
          %146 = vsyncadd [#allocation6], 0
          %s148 = sshll.u32 %s1, 4
          %s149 = int_to_ptr.vmem [resolvable:$true] %s148
          %151 = dma.vmem_to_smem %s149, 128, [#allocation7], [#allocation6]
        $region16: #{tpu_custom_call.1} parent=11 // pred_fallthru
          _
        // Predicated region
        $region17: #{tpu_custom_call.1} parent=11 // pred_check
          %p152 = pneg %p99
        $region18: #{tpu_custom_call.1} parent=11 // pred_check_branch
          %154 = sbr.rel (%p152) target = $region20
        $region19: #{tpu_custom_call.1} parent=11 // pred_region
          %156 = vsyncadd [#allocation9], 0
          %s157 = sshll.u32 %s2, 4
          %s158 = int_to_ptr.hbm [resolvable:$true] %s157
          %s159 = sshll.u32 [#allocation8], 4
          %s160 = int_to_ptr.vmem [resolvable:$true] %s159
          %165 = dma.hbm_to_vmem [thread:$0]  %s158, 32768, %s160, [#allocation9], 1024, 1024, 64
        $region20: #{tpu_custom_call.1} parent=11 // pred_fallthru
          _
      $region12: #{tpu_custom_call.1} parent=5 // pred_fallthru
        _
      %p166 = scmp.lt.s32.totalorder %s17, 2
      // Predicated region
      $region21: #{tpu_custom_call.1} parent=5 // pred_check
        %p167 = pneg %p166
      $region22: #{tpu_custom_call.1} parent=5 // pred_check_branch
        %169 = sbr.rel (%p167) target = $region24
      $region23: #{tpu_custom_call.1} parent=5 // pred_region
        // Predicated region
        $region25: #{tpu_custom_call.1} parent=23 // pred_check
          %p170 = pneg %p51
        $region26: #{tpu_custom_call.1} parent=23 // pred_check_branch
          %172 = sbr.rel (%p170) target = $region28
        $region27: #{tpu_custom_call.1} parent=23 // pred_region
          %s173 = sand.u32 %s41, 1
          %s174 = scalar_lea.sflag [#allocation4], %s173
          %s175 = sand.u32 %s41, 1
          %s176 = smul.addr %s175, 8
          %s177 = scalar_lea.vmem [#allocation3], %s176
          %s178 = smul.u32 2, %s25
          %180 = vsyncadd %s174, 0
          %s181 = smul.addr %s24, 2
          %s182 = sadd.s32 %s178, %s181
          %s183 = smul.addr %s182, 4
          %s184 = scalar_lea.hbm %s0, %s183
          %s186 = sshll.u32 %s184, 4
          %s187 = int_to_ptr.hbm [resolvable:$true] %s186
          %s188 = sshll.u32 %s177, 4
          %s189 = int_to_ptr.vmem [resolvable:$true] %s188
          %191 = dma.hbm_to_vmem [thread:$0]  %s187, 128, %s189, %s174
        $region28: #{tpu_custom_call.1} parent=23 // pred_fallthru
          _
      $region24: #{tpu_custom_call.1} parent=5 // pred_fallthru
        _
      %p192 = scmp.le.s32.totalorder 1, %s17
      %p193 = scmp.lt.s32.totalorder %s17, 3
      %p194 = pnand %p192, %p193
      %p195 = pneg %p194
      // Predicated region
      $region29: #{tpu_custom_call.1} parent=5 // pred_check
        _
      $region30: #{tpu_custom_call.1} parent=5 // pred_check_branch
        %197 = sbr.rel (%p194) target = $region32
      $region31: #{tpu_custom_call.1} parent=5 // pred_region
        %s198 = ssub.s32 %s17, 1
        %s199 = sand.u32 %s44, 1
        %s200 = scalar_lea.sflag [#allocation4], %s199
        %s201 = sand.u32 %s44, 1
        %s202 = smul.addr %s201, 8
        %s203 = scalar_lea.vmem [#allocation3], %s202
        // Predicated region
        $region33: #{tpu_custom_call.1} parent=31 // pred_check
          %p204 = pneg %p57
        $region34: #{tpu_custom_call.1} parent=31 // pred_check_branch
          %206 = sbr.rel (%p204) target = $region36
        $region35: #{tpu_custom_call.1} parent=31 // pred_region
          %208 = dma.done %s200, 128
        $region36: #{tpu_custom_call.1} parent=31 // pred_fallthru
          _
        // Predicated region
        $region37: #{tpu_custom_call.1} parent=31 // pred_check
          %p209 = pneg %p78
        $region38: #{tpu_custom_call.1} parent=31 // pred_check_branch
          %211 = sbr.rel (%p209) target = $region40
        $region39: #{tpu_custom_call.1} parent=31 // pred_region
          %213 = dma.done [#allocation6], 128
        $region40: #{tpu_custom_call.1} parent=31 // pred_fallthru
          _
        // Predicated region
        $region41: #{tpu_custom_call.1} parent=31 // pred_check
          %p214 = pneg %p99
        $region42: #{tpu_custom_call.1} parent=31 // pred_check_branch
          %216 = sbr.rel (%p214) target = $region44
        $region43: #{tpu_custom_call.1} parent=31 // pred_region
          %218 = dma.done [#allocation9], 32768
        $region44: #{tpu_custom_call.1} parent=31 // pred_fallthru
          _
        %219 = sfence
        %s220 = sand.u32 %s44, 1
        %s221 = scalar_lea.sflag [#allocation4], %s220
        %s222 = sand.u32 %s44, 1
        %s223 = smul.addr %s222, 8
        %s224 = scalar_lea.vmem [#allocation3], %s223
        %p225 = pneg %p57
        %p226 = pneg %p54
        %p227 = pneg %p78
        %p228 = pneg %p75
        %p229 = pneg %p99
        %p230 = pneg %p96
        %p231 = pneg %p127
        %p232 = pneg %p124
        %s233 = sand.u32 %s114, 1
        %s234 = scalar_lea.sflag [#allocation5], %s233
        %s235 = sand.u32 %s114, 1
        %s236 = smul.addr %s235, 64
        %s237 = scalar_lea.vmem [#allocation10], %s236
        %s238 = smul.u32 2, %s27
        %s239 = smul.u32 8, %s27
        %v240 = vld [vmem:[%s203] sm:$0xff]
        %s241 = sld [smem:[#allocation7]]
        %v242 = vstv %s241
        %v243 = vmul.f32 %v240, %v242
        %s244 = sld [smem:[#allocation7 + $0x1]]
        %v245 = vstv %s244
        %v246 = vmul.f32 %v240, %v245
        %v248 = vrot.slane %v246, 5
        %v249 = vrot.slane %v248, 4
        %v251 = vadd.f32 %v243, %v249
        %s252 = sld [smem:[#allocation7 + $0x2]]
        %v253 = vstv %s252
        %v254 = vmul.f32 %v240, %v253
        %v256 = vrot.slane %v254, 6
        %v257 = vrot.slane %v256, 4
        %v259 = vadd.f32 %v251, %v257
        %s260 = sld [smem:[#allocation7 + $0x3]]
        %v261 = vstv %s260
        %v262 = vmul.f32 %v240, %v261
        %v264 = vrot.slane %v262, 7
        %v265 = vrot.slane %v264, 4
        %v267 = vadd.f32 %v259, %v265
        %v269 = vrot.slane %v267, 3
        %vm270 = vcmask 1040384
        %v271 = vsel %vm270, %v267, %v269
        %v273 = vlaneseq
        %vm274 = vcmp.ge.s32.totalorder %v273, 0
        %vm275 = vcmp.lt.s32.totalorder %v273, 256
        %vm276 = vmand %vm274, %vm275
        %277 = vst.msk [vmem:[#allocation2] ss:$8 sm:$0x3] %vm276, %v271
        %278 = vst.msk [vmem:[#allocation2] ss:$8 sm:$0x0] %vm276, %v271
        %s279 = sld [smem:[#allocation7 + $0x80]]
        %v280 = vstv %s279
        %v281 = vmul.f32 %v240, %v280
        %s282 = sld [smem:[#allocation7 + $0x81]]
        %v283 = vstv %s282
        %v284 = vmul.f32 %v240, %v283
        %v286 = vrot.slane %v284, 5
        %v287 = vrot.slane %v286, 4
        %v289 = vadd.f32 %v281, %v287
        %s290 = sld [smem:[#allocation7 + $0x82]]
        %v291 = vstv %s290
        %v292 = vmul.f32 %v240, %v291
        %v294 = vrot.slane %v292, 6
        %v295 = vrot.slane %v294, 4
        %v297 = vadd.f32 %v289, %v295
        %s298 = sld [smem:[#allocation7 + $0x83]]
        %v299 = vstv %s298
        %v300 = vmul.f32 %v240, %v299
        %v302 = vrot.slane %v300, 7
        %v303 = vrot.slane %v302, 4
        %v305 = vadd.f32 %v297, %v303
        %v307 = vrot.slane %v305, 3
        %v308 = vsel %vm270, %v305, %v307
        %s310 = scalar_lea.vmem [#allocation2], 1
        %311 = vst.msk [vmem:[%s310] ss:$8 sm:$0x3] %vm276, %v308
        %312 = vst.msk [vmem:[%s310] ss:$8 sm:$0x0] %vm276, %v308
        %s313 = sld [smem:[#allocation7 + $0x100]]
        %v314 = vstv %s313
        %v315 = vmul.f32 %v240, %v314
        %s316 = sld [smem:[#allocation7 + $0x101]]
        %v317 = vstv %s316
        %v318 = vmul.f32 %v240, %v317
        %v320 = vrot.slane %v318, 5
        %v321 = vrot.slane %v320, 4
        %v323 = vadd.f32 %v315, %v321
        %s324 = sld [smem:[#allocation7 + $0x102]]
        %v325 = vstv %s324
        %v326 = vmul.f32 %v240, %v325
        %v328 = vrot.slane %v326, 6
        %v329 = vrot.slane %v328, 4
        %v331 = vadd.f32 %v323, %v329
        %s332 = sld [smem:[#allocation7 + $0x103]]
        %v333 = vstv %s332
        %v334 = vmul.f32 %v240, %v333
        %v336 = vrot.slane %v334, 7
        %v337 = vrot.slane %v336, 4
        %v339 = vadd.f32 %v331, %v337
        %v341 = vrot.slane %v339, 3
        %v342 = vsel %vm270, %v339, %v341
        %s344 = scalar_lea.vmem [#allocation2], 2
        %345 = vst.msk [vmem:[%s344] ss:$8 sm:$0x3] %vm276, %v342
        %346 = vst.msk [vmem:[%s344] ss:$8 sm:$0x0] %vm276, %v342
        %s347 = sld [smem:[#allocation7 + $0x180]]
        %v348 = vstv %s347
        %v349 = vmul.f32 %v240, %v348
        %s350 = sld [smem:[#allocation7 + $0x181]]
        %v351 = vstv %s350
        %v352 = vmul.f32 %v240, %v351
        %v354 = vrot.slane %v352, 5
        %v355 = vrot.slane %v354, 4
        %v357 = vadd.f32 %v349, %v355
        %s358 = sld [smem:[#allocation7 + $0x182]]
        %v359 = vstv %s358
        %v360 = vmul.f32 %v240, %v359
        %v362 = vrot.slane %v360, 6
        %v363 = vrot.slane %v362, 4
        %v365 = vadd.f32 %v357, %v363
        %s366 = sld [smem:[#allocation7 + $0x183]]
        %v367 = vstv %s366
        %v368 = vmul.f32 %v240, %v367
        %v370 = vrot.slane %v368, 7
        %v371 = vrot.slane %v370, 4
        %v373 = vadd.f32 %v365, %v371
        %v375 = vrot.slane %v373, 3
        %v376 = vsel %vm270, %v373, %v375
        %s378 = scalar_lea.vmem [#allocation2], 3
        %379 = vst.msk [vmem:[%s378] ss:$8 sm:$0x3] %vm276, %v376
        %380 = vst.msk [vmem:[%s378] ss:$8 sm:$0x0] %vm276, %v376
        %s381 = sld [smem:[#allocation7 + $0x200]]
        %v382 = vstv %s381
        %v383 = vmul.f32 %v240, %v382
        %s384 = sld [smem:[#allocation7 + $0x201]]
        %v385 = vstv %s384
        %v386 = vmul.f32 %v240, %v385
        %v388 = vrot.slane %v386, 5
        %v389 = vrot.slane %v388, 4
        %v391 = vadd.f32 %v383, %v389
        %s392 = sld [smem:[#allocation7 + $0x202]]
        %v393 = vstv %s392
        %v394 = vmul.f32 %v240, %v393
        %v396 = vrot.slane %v394, 6
        %v397 = vrot.slane %v396, 4
        %v399 = vadd.f32 %v391, %v397
        %s400 = sld [smem:[#allocation7 + $0x203]]
        %v401 = vstv %s400
        %v402 = vmul.f32 %v240, %v401
        %v404 = vrot.slane %v402, 7
        %v405 = vrot.slane %v404, 4
        %v407 = vadd.f32 %v399, %v405
        %v409 = vrot.slane %v407, 3
        %v410 = vsel %vm270, %v407, %v409
        %s412 = scalar_lea.vmem [#allocation2], 4
        %413 = vst.msk [vmem:[%s412] ss:$8 sm:$0x3] %vm276, %v410
        %414 = vst.msk [vmem:[%s412] ss:$8 sm:$0x0] %vm276, %v410
        %s415 = sld [smem:[#allocation7 + $0x280]]
        %v416 = vstv %s415
        %v417 = vmul.f32 %v240, %v416
        %s418 = sld [smem:[#allocation7 + $0x281]]
        %v419 = vstv %s418
        %v420 = vmul.f32 %v240, %v419
        %v422 = vrot.slane %v420, 5
        %v423 = vrot.slane %v422, 4
        %v425 = vadd.f32 %v417, %v423
        %s426 = sld [smem:[#allocation7 + $0x282]]
        %v427 = vstv %s426
        %v428 = vmul.f32 %v240, %v427
        %v430 = vrot.slane %v428, 6
        %v431 = vrot.slane %v430, 4
        %v433 = vadd.f32 %v425, %v431
        %s434 = sld [smem:[#allocation7 + $0x283]]
        %v435 = vstv %s434
        %v436 = vmul.f32 %v240, %v435
        %v438 = vrot.slane %v436, 7
        %v439 = vrot.slane %v438, 4
        %v441 = vadd.f32 %v433, %v439
        %v443 = vrot.slane %v441, 3
        %v444 = vsel %vm270, %v441, %v443
        %s446 = scalar_lea.vmem [#allocation2], 5
        %447 = vst.msk [vmem:[%s446] ss:$8 sm:$0x3] %vm276, %v444
        %448 = vst.msk [vmem:[%s446] ss:$8 sm:$0x0] %vm276, %v444
        %s449 = sld [smem:[#allocation7 + $0x300]]
        %v450 = vstv %s449
        %v451 = vmul.f32 %v240, %v450
        %s452 = sld [smem:[#allocation7 + $0x301]]
        %v453 = vstv %s452
        %v454 = vmul.f32 %v240, %v453
        %v456 = vrot.slane %v454, 5
        %v457 = vrot.slane %v456, 4
        %v459 = vadd.f32 %v451, %v457
        %s460 = sld [smem:[#allocation7 + $0x302]]
        %v461 = vstv %s460
        %v462 = vmul.f32 %v240, %v461
        %v464 = vrot.slane %v462, 6
        %v465 = vrot.slane %v464, 4
        %v467 = vadd.f32 %v459, %v465
        %s468 = sld [smem:[#allocation7 + $0x303]]
        %v469 = vstv %s468
        %v470 = vmul.f32 %v240, %v469
        %v472 = vrot.slane %v470, 7
        %v473 = vrot.slane %v472, 4
        %v475 = vadd.f32 %v467, %v473
        %v477 = vrot.slane %v475, 3
        %v478 = vsel %vm270, %v475, %v477
        %s480 = scalar_lea.vmem [#allocation2], 6
        %481 = vst.msk [vmem:[%s480] ss:$8 sm:$0x3] %vm276, %v478
        %482 = vst.msk [vmem:[%s480] ss:$8 sm:$0x0] %vm276, %v478
        %s483 = sld [smem:[#allocation7 + $0x380]]
        %v484 = vstv %s483
        %v485 = vmul.f32 %v240, %v484
        %s486 = sld [smem:[#allocation7 + $0x381]]
        %v487 = vstv %s486
        %v488 = vmul.f32 %v240, %v487
        %v490 = vrot.slane %v488, 5
        %v491 = vrot.slane %v490, 4
        %v493 = vadd.f32 %v485, %v491
        %s494 = sld [smem:[#allocation7 + $0x382]]
        %v495 = vstv %s494
        %v496 = vmul.f32 %v240, %v495
        %v498 = vrot.slane %v496, 6
        %v499 = vrot.slane %v498, 4
        %v501 = vadd.f32 %v493, %v499
        %s502 = sld [smem:[#allocation7 + $0x383]]
        %v503 = vstv %s502
        %v504 = vmul.f32 %v240, %v503
        %v506 = vrot.slane %v504, 7
        %v507 = vrot.slane %v506, 4
        %v509 = vadd.f32 %v501, %v507
        %v511 = vrot.slane %v509, 3
        %v512 = vsel %vm270, %v509, %v511
        %s514 = scalar_lea.vmem [#allocation2], 7
        %515 = vst.msk [vmem:[%s514] ss:$8 sm:$0x3] %vm276, %v512
        %516 = vst.msk [vmem:[%s514] ss:$8 sm:$0x0] %vm276, %v512
        %v517 = vld [vmem:[#allocation2] sm:$0xff]
        %v518 = vld [vmem:[#allocation2 + $0x8] sm:$0xff]
        %v519 = vld [vmem:[#allocation8] sm:$0xff]
        %v520 = vld [vmem:[#allocation8 + $0x8] sm:$0xff]
        %v521 = vld [vmem:[#allocation8 + $0x10] sm:$0xff]
        %v522 = vld [vmem:[#allocation8 + $0x18] sm:$0xff]
        %v523 = vld [vmem:[#allocation8 + $0x20] sm:$0xff]
        %v524 = vld [vmem:[#allocation8 + $0x28] sm:$0xff]
        %v525 = vld [vmem:[#allocation8 + $0x30] sm:$0xff]
        %v526 = vld [vmem:[#allocation8 + $0x38] sm:$0xff]
        %v527 = vld [vmem:[#allocation8 + $0x40] sm:$0xff]
        %v528 = vld [vmem:[#allocation8 + $0x48] sm:$0xff]
        %v529 = vld [vmem:[#allocation8 + $0x50] sm:$0xff]
        %v530 = vld [vmem:[#allocation8 + $0x58] sm:$0xff]
        %v531 = vld [vmem:[#allocation8 + $0x60] sm:$0xff]
        %v532 = vld [vmem:[#allocation8 + $0x68] sm:$0xff]
        %v533 = vld [vmem:[#allocation8 + $0x70] sm:$0xff]
        %v534 = vld [vmem:[#allocation8 + $0x78] sm:$0xff]
        %v535 = vld [vmem:[#allocation8 + $0x80] sm:$0xff]
        %v536 = vld [vmem:[#allocation8 + $0x88] sm:$0xff]
        %v537 = vld [vmem:[#allocation8 + $0x90] sm:$0xff]
        %v538 = vld [vmem:[#allocation8 + $0x98] sm:$0xff]
        %v539 = vld [vmem:[#allocation8 + $0xa0] sm:$0xff]
        %v540 = vld [vmem:[#allocation8 + $0xa8] sm:$0xff]
        %v541 = vld [vmem:[#allocation8 + $0xb0] sm:$0xff]
        %v542 = vld [vmem:[#allocation8 + $0xb8] sm:$0xff]
        %v543 = vld [vmem:[#allocation8 + $0xc0] sm:$0xff]
        %v544 = vld [vmem:[#allocation8 + $0xc8] sm:$0xff]
        %v545 = vld [vmem:[#allocation8 + $0xd0] sm:$0xff]
        %v546 = vld [vmem:[#allocation8 + $0xd8] sm:$0xff]
        %v547 = vld [vmem:[#allocation8 + $0xe0] sm:$0xff]
        %v548 = vld [vmem:[#allocation8 + $0xe8] sm:$0xff]
        %v549 = vld [vmem:[#allocation8 + $0xf0] sm:$0xff]
        %v550 = vld [vmem:[#allocation8 + $0xf8] sm:$0xff]
        %v551 = vld [vmem:[#allocation8 + $0x100] sm:$0xff]
        %v552 = vld [vmem:[#allocation8 + $0x108] sm:$0xff]
        %v553 = vld [vmem:[#allocation8 + $0x110] sm:$0xff]
        %v554 = vld [vmem:[#allocation8 + $0x118] sm:$0xff]
        %v555 = vld [vmem:[#allocation8 + $0x120] sm:$0xff]
        %v556 = vld [vmem:[#allocation8 + $0x128] sm:$0xff]
        %v557 = vld [vmem:[#allocation8 + $0x130] sm:$0xff]
        %v558 = vld [vmem:[#allocation8 + $0x138] sm:$0xff]
        %v559 = vld [vmem:[#allocation8 + $0x140] sm:$0xff]
        %v560 = vld [vmem:[#allocation8 + $0x148] sm:$0xff]
        %v561 = vld [vmem:[#allocation8 + $0x150] sm:$0xff]
        %v562 = vld [vmem:[#allocation8 + $0x158] sm:$0xff]
        %v563 = vld [vmem:[#allocation8 + $0x160] sm:$0xff]
        %v564 = vld [vmem:[#allocation8 + $0x168] sm:$0xff]
        %v565 = vld [vmem:[#allocation8 + $0x170] sm:$0xff]
        %v566 = vld [vmem:[#allocation8 + $0x178] sm:$0xff]
        %v567 = vld [vmem:[#allocation8 + $0x180] sm:$0xff]
        %v568 = vld [vmem:[#allocation8 + $0x188] sm:$0xff]
        %v569 = vld [vmem:[#allocation8 + $0x190] sm:$0xff]
        %v570 = vld [vmem:[#allocation8 + $0x198] sm:$0xff]
        %v571 = vld [vmem:[#allocation8 + $0x1a0] sm:$0xff]
        %v572 = vld [vmem:[#allocation8 + $0x1a8] sm:$0xff]
        %v573 = vld [vmem:[#allocation8 + $0x1b0] sm:$0xff]
        %v574 = vld [vmem:[#allocation8 + $0x1b8] sm:$0xff]
        %v575 = vld [vmem:[#allocation8 + $0x1c0] sm:$0xff]
        %v576 = vld [vmem:[#allocation8 + $0x1c8] sm:$0xff]
        %v577 = vld [vmem:[#allocation8 + $0x1d0] sm:$0xff]
        %v578 = vld [vmem:[#allocation8 + $0x1d8] sm:$0xff]
        %v579 = vld [vmem:[#allocation8 + $0x1e0] sm:$0xff]
        %v580 = vld [vmem:[#allocation8 + $0x1e8] sm:$0xff]
        %v581 = vld [vmem:[#allocation8 + $0x1f0] sm:$0xff]
        %v582 = vld [vmem:[#allocation8 + $0x1f8] sm:$0xff]
        %v583 = vld [vmem:[#allocation8 + $0x200] sm:$0xff]
        %v584 = vld [vmem:[#allocation8 + $0x208] sm:$0xff]
        %v585 = vld [vmem:[#allocation8 + $0x210] sm:$0xff]
        %v586 = vld [vmem:[#allocation8 + $0x218] sm:$0xff]
        %v587 = vld [vmem:[#allocation8 + $0x220] sm:$0xff]
        %v588 = vld [vmem:[#allocation8 + $0x228] sm:$0xff]
        %v589 = vld [vmem:[#allocation8 + $0x230] sm:$0xff]
        %v590 = vld [vmem:[#allocation8 + $0x238] sm:$0xff]
        %v591 = vld [vmem:[#allocation8 + $0x240] sm:$0xff]
        %v592 = vld [vmem:[#allocation8 + $0x248] sm:$0xff]
        %v593 = vld [vmem:[#allocation8 + $0x250] sm:$0xff]
        %v594 = vld [vmem:[#allocation8 + $0x258] sm:$0xff]
        %v595 = vld [vmem:[#allocation8 + $0x260] sm:$0xff]
        %v596 = vld [vmem:[#allocation8 + $0x268] sm:$0xff]
        %v597 = vld [vmem:[#allocation8 + $0x270] sm:$0xff]
        %v598 = vld [vmem:[#allocation8 + $0x278] sm:$0xff]
        %v599 = vld [vmem:[#allocation8 + $0x280] sm:$0xff]
        %v600 = vld [vmem:[#allocation8 + $0x288] sm:$0xff]
        %v601 = vld [vmem:[#allocation8 + $0x290] sm:$0xff]
        %v602 = vld [vmem:[#allocation8 + $0x298] sm:$0xff]
        %v603 = vld [vmem:[#allocation8 + $0x2a0] sm:$0xff]
        %v604 = vld [vmem:[#allocation8 + $0x2a8] sm:$0xff]
        %v605 = vld [vmem:[#allocation8 + $0x2b0] sm:$0xff]
        %v606 = vld [vmem:[#allocation8 + $0x2b8] sm:$0xff]
        %v607 = vld [vmem:[#allocation8 + $0x2c0] sm:$0xff]
        %v608 = vld [vmem:[#allocation8 + $0x2c8] sm:$0xff]
        %v609 = vld [vmem:[#allocation8 + $0x2d0] sm:$0xff]
        %v610 = vld [vmem:[#allocation8 + $0x2d8] sm:$0xff]
        %v611 = vld [vmem:[#allocation8 + $0x2e0] sm:$0xff]
        %v612 = vld [vmem:[#allocation8 + $0x2e8] sm:$0xff]
        %v613 = vld [vmem:[#allocation8 + $0x2f0] sm:$0xff]
        %v614 = vld [vmem:[#allocation8 + $0x2f8] sm:$0xff]
        %v615 = vld [vmem:[#allocation8 + $0x300] sm:$0xff]
        %v616 = vld [vmem:[#allocation8 + $0x308] sm:$0xff]
        %v617 = vld [vmem:[#allocation8 + $0x310] sm:$0xff]
        %v618 = vld [vmem:[#allocation8 + $0x318] sm:$0xff]
        %v619 = vld [vmem:[#allocation8 + $0x320] sm:$0xff]
        %v620 = vld [vmem:[#allocation8 + $0x328] sm:$0xff]
        %v621 = vld [vmem:[#allocation8 + $0x330] sm:$0xff]
        %v622 = vld [vmem:[#allocation8 + $0x338] sm:$0xff]
        %v623 = vld [vmem:[#allocation8 + $0x340] sm:$0xff]
        %v624 = vld [vmem:[#allocation8 + $0x348] sm:$0xff]
        %v625 = vld [vmem:[#allocation8 + $0x350] sm:$0xff]
        %v626 = vld [vmem:[#allocation8 + $0x358] sm:$0xff]
        %v627 = vld [vmem:[#allocation8 + $0x360] sm:$0xff]
        %v628 = vld [vmem:[#allocation8 + $0x368] sm:$0xff]
        %v629 = vld [vmem:[#allocation8 + $0x370] sm:$0xff]
        %v630 = vld [vmem:[#allocation8 + $0x378] sm:$0xff]
        %v631 = vld [vmem:[#allocation8 + $0x380] sm:$0xff]
        %v632 = vld [vmem:[#allocation8 + $0x388] sm:$0xff]
        %v633 = vld [vmem:[#allocation8 + $0x390] sm:$0xff]
        %v634 = vld [vmem:[#allocation8 + $0x398] sm:$0xff]
        %v635 = vld [vmem:[#allocation8 + $0x3a0] sm:$0xff]
        %v636 = vld [vmem:[#allocation8 + $0x3a8] sm:$0xff]
        %v637 = vld [vmem:[#allocation8 + $0x3b0] sm:$0xff]
        %v638 = vld [vmem:[#allocation8 + $0x3b8] sm:$0xff]
        %v639 = vld [vmem:[#allocation8 + $0x3c0] sm:$0xff]
        %v640 = vld [vmem:[#allocation8 + $0x3c8] sm:$0xff]
        %v641 = vld [vmem:[#allocation8 + $0x3d0] sm:$0xff]
        %v642 = vld [vmem:[#allocation8 + $0x3d8] sm:$0xff]
        %v643 = vld [vmem:[#allocation8 + $0x3e0] sm:$0xff]
        %v644 = vld [vmem:[#allocation8 + $0x3e8] sm:$0xff]
        %v645 = vld [vmem:[#allocation8 + $0x3f0] sm:$0xff]
        %v646 = vld [vmem:[#allocation8 + $0x3f8] sm:$0xff]
        %v647 = vld [vmem:[#allocation8 + $0x400] sm:$0xff]
        %v648 = vld [vmem:[#allocation8 + $0x408] sm:$0xff]
        %v649 = vld [vmem:[#allocation8 + $0x410] sm:$0xff]
        %v650 = vld [vmem:[#allocation8 + $0x418] sm:$0xff]
        %v651 = vld [vmem:[#allocation8 + $0x420] sm:$0xff]
        %v652 = vld [vmem:[#allocation8 + $0x428] sm:$0xff]
        %v653 = vld [vmem:[#allocation8 + $0x430] sm:$0xff]
        %v654 = vld [vmem:[#allocation8 + $0x438] sm:$0xff]
        %v655 = vld [vmem:[#allocation8 + $0x440] sm:$0xff]
        %v656 = vld [vmem:[#allocation8 + $0x448] sm:$0xff]
        %v657 = vld [vmem:[#allocation8 + $0x450] sm:$0xff]
        %v658 = vld [vmem:[#allocation8 + $0x458] sm:$0xff]
        %v659 = vld [vmem:[#allocation8 + $0x460] sm:$0xff]
        %v660 = vld [vmem:[#allocation8 + $0x468] sm:$0xff]
        %v661 = vld [vmem:[#allocation8 + $0x470] sm:$0xff]
        %v662 = vld [vmem:[#allocation8 + $0x478] sm:$0xff]
        %v663 = vld [vmem:[#allocation8 + $0x480] sm:$0xff]
        %v664 = vld [vmem:[#allocation8 + $0x488] sm:$0xff]
        %v665 = vld [vmem:[#allocation8 + $0x490] sm:$0xff]
        %v666 = vld [vmem:[#allocation8 + $0x498] sm:$0xff]
        %v667 = vld [vmem:[#allocation8 + $0x4a0] sm:$0xff]
        %v668 = vld [vmem:[#allocation8 + $0x4a8] sm:$0xff]
        %v669 = vld [vmem:[#allocation8 + $0x4b0] sm:$0xff]
        %v670 = vld [vmem:[#allocation8 + $0x4b8] sm:$0xff]
        %v671 = vld [vmem:[#allocation8 + $0x4c0] sm:$0xff]
        %v672 = vld [vmem:[#allocation8 + $0x4c8] sm:$0xff]
        %v673 = vld [vmem:[#allocation8 + $0x4d0] sm:$0xff]
        %v674 = vld [vmem:[#allocation8 + $0x4d8] sm:$0xff]
        %v675 = vld [vmem:[#allocation8 + $0x4e0] sm:$0xff]
        %v676 = vld [vmem:[#allocation8 + $0x4e8] sm:$0xff]
        %v677 = vld [vmem:[#allocation8 + $0x4f0] sm:$0xff]
        %v678 = vld [vmem:[#allocation8 + $0x4f8] sm:$0xff]
        %v679 = vld [vmem:[#allocation8 + $0x500] sm:$0xff]
        %v680 = vld [vmem:[#allocation8 + $0x508] sm:$0xff]
        %v681 = vld [vmem:[#allocation8 + $0x510] sm:$0xff]
        %v682 = vld [vmem:[#allocation8 + $0x518] sm:$0xff]
        %v683 = vld [vmem:[#allocation8 + $0x520] sm:$0xff]
        %v684 = vld [vmem:[#allocation8 + $0x528] sm:$0xff]
        %v685 = vld [vmem:[#allocation8 + $0x530] sm:$0xff]
        %v686 = vld [vmem:[#allocation8 + $0x538] sm:$0xff]
        %v687 = vld [vmem:[#allocation8 + $0x540] sm:$0xff]
        %v688 = vld [vmem:[#allocation8 + $0x548] sm:$0xff]
        %v689 = vld [vmem:[#allocation8 + $0x550] sm:$0xff]
        %v690 = vld [vmem:[#allocation8 + $0x558] sm:$0xff]
        %v691 = vld [vmem:[#allocation8 + $0x560] sm:$0xff]
        %v692 = vld [vmem:[#allocation8 + $0x568] sm:$0xff]
        %v693 = vld [vmem:[#allocation8 + $0x570] sm:$0xff]
        %v694 = vld [vmem:[#allocation8 + $0x578] sm:$0xff]
        %v695 = vld [vmem:[#allocation8 + $0x580] sm:$0xff]
        %v696 = vld [vmem:[#allocation8 + $0x588] sm:$0xff]
        %v697 = vld [vmem:[#allocation8 + $0x590] sm:$0xff]
        %v698 = vld [vmem:[#allocation8 + $0x598] sm:$0xff]
        %v699 = vld [vmem:[#allocation8 + $0x5a0] sm:$0xff]
        %v700 = vld [vmem:[#allocation8 + $0x5a8] sm:$0xff]
        %v701 = vld [vmem:[#allocation8 + $0x5b0] sm:$0xff]
        %v702 = vld [vmem:[#allocation8 + $0x5b8] sm:$0xff]
        %v703 = vld [vmem:[#allocation8 + $0x5c0] sm:$0xff]
        %v704 = vld [vmem:[#allocation8 + $0x5c8] sm:$0xff]
        %v705 = vld [vmem:[#allocation8 + $0x5d0] sm:$0xff]
        %v706 = vld [vmem:[#allocation8 + $0x5d8] sm:$0xff]
        %v707 = vld [vmem:[#allocation8 + $0x5e0] sm:$0xff]
        %v708 = vld [vmem:[#allocation8 + $0x5e8] sm:$0xff]
        %v709 = vld [vmem:[#allocation8 + $0x5f0] sm:$0xff]
        %v710 = vld [vmem:[#allocation8 + $0x5f8] sm:$0xff]
        %v711 = vld [vmem:[#allocation8 + $0x600] sm:$0xff]
        %v712 = vld [vmem:[#allocation8 + $0x608] sm:$0xff]
        %v713 = vld [vmem:[#allocation8 + $0x610] sm:$0xff]
        %v714 = vld [vmem:[#allocation8 + $0x618] sm:$0xff]
        %v715 = vld [vmem:[#allocation8 + $0x620] sm:$0xff]
        %v716 = vld [vmem:[#allocation8 + $0x628] sm:$0xff]
        %v717 = vld [vmem:[#allocation8 + $0x630] sm:$0xff]
        %v718 = vld [vmem:[#allocation8 + $0x638] sm:$0xff]
        %v719 = vld [vmem:[#allocation8 + $0x640] sm:$0xff]
        %v720 = vld [vmem:[#allocation8 + $0x648] sm:$0xff]
        %v721 = vld [vmem:[#allocation8 + $0x650] sm:$0xff]
        %v722 = vld [vmem:[#allocation8 + $0x658] sm:$0xff]
        %v723 = vld [vmem:[#allocation8 + $0x660] sm:$0xff]
        %v724 = vld [vmem:[#allocation8 + $0x668] sm:$0xff]
        %v725 = vld [vmem:[#allocation8 + $0x670] sm:$0xff]
        %v726 = vld [vmem:[#allocation8 + $0x678] sm:$0xff]
        %v727 = vld [vmem:[#allocation8 + $0x680] sm:$0xff]
        %v728 = vld [vmem:[#allocation8 + $0x688] sm:$0xff]
        %v729 = vld [vmem:[#allocation8 + $0x690] sm:$0xff]
        %v730 = vld [vmem:[#allocation8 + $0x698] sm:$0xff]
        %v731 = vld [vmem:[#allocation8 + $0x6a0] sm:$0xff]
        %v732 = vld [vmem:[#allocation8 + $0x6a8] sm:$0xff]
        %v733 = vld [vmem:[#allocation8 + $0x6b0] sm:$0xff]
        %v734 = vld [vmem:[#allocation8 + $0x6b8] sm:$0xff]
        %v735 = vld [vmem:[#allocation8 + $0x6c0] sm:$0xff]
        %v736 = vld [vmem:[#allocation8 + $0x6c8] sm:$0xff]
        %v737 = vld [vmem:[#allocation8 + $0x6d0] sm:$0xff]
        %v738 = vld [vmem:[#allocation8 + $0x6d8] sm:$0xff]
        %v739 = vld [vmem:[#allocation8 + $0x6e0] sm:$0xff]
        %v740 = vld [vmem:[#allocation8 + $0x6e8] sm:$0xff]
        %v741 = vld [vmem:[#allocation8 + $0x6f0] sm:$0xff]
        %v742 = vld [vmem:[#allocation8 + $0x6f8] sm:$0xff]
        %v743 = vld [vmem:[#allocation8 + $0x700] sm:$0xff]
        %v744 = vld [vmem:[#allocation8 + $0x708] sm:$0xff]
        %v745 = vld [vmem:[#allocation8 + $0x710] sm:$0xff]
        %v746 = vld [vmem:[#allocation8 + $0x718] sm:$0xff]
        %v747 = vld [vmem:[#allocation8 + $0x720] sm:$0xff]
        %v748 = vld [vmem:[#allocation8 + $0x728] sm:$0xff]
        %v749 = vld [vmem:[#allocation8 + $0x730] sm:$0xff]
        %v750 = vld [vmem:[#allocation8 + $0x738] sm:$0xff]
        %v751 = vld [vmem:[#allocation8 + $0x740] sm:$0xff]
        %v752 = vld [vmem:[#allocation8 + $0x748] sm:$0xff]
        %v753 = vld [vmem:[#allocation8 + $0x750] sm:$0xff]
        %v754 = vld [vmem:[#allocation8 + $0x758] sm:$0xff]
        %v755 = vld [vmem:[#allocation8 + $0x760] sm:$0xff]
        %v756 = vld [vmem:[#allocation8 + $0x768] sm:$0xff]
        %v757 = vld [vmem:[#allocation8 + $0x770] sm:$0xff]
        %v758 = vld [vmem:[#allocation8 + $0x778] sm:$0xff]
        %v759 = vld [vmem:[#allocation8 + $0x780] sm:$0xff]
        %v760 = vld [vmem:[#allocation8 + $0x788] sm:$0xff]
        %v761 = vld [vmem:[#allocation8 + $0x790] sm:$0xff]
        %v762 = vld [vmem:[#allocation8 + $0x798] sm:$0xff]
        %v763 = vld [vmem:[#allocation8 + $0x7a0] sm:$0xff]
        %v764 = vld [vmem:[#allocation8 + $0x7a8] sm:$0xff]
        %v765 = vld [vmem:[#allocation8 + $0x7b0] sm:$0xff]
        %v766 = vld [vmem:[#allocation8 + $0x7b8] sm:$0xff]
        %v767 = vld [vmem:[#allocation8 + $0x7c0] sm:$0xff]
        %v768 = vld [vmem:[#allocation8 + $0x7c8] sm:$0xff]
        %v769 = vld [vmem:[#allocation8 + $0x7d0] sm:$0xff]
        %v770 = vld [vmem:[#allocation8 + $0x7d8] sm:$0xff]
        %v771 = vld [vmem:[#allocation8 + $0x7e0] sm:$0xff]
        %v772 = vld [vmem:[#allocation8 + $0x7e8] sm:$0xff]
        %v773 = vld [vmem:[#allocation8 + $0x7f0] sm:$0xff]
        %v774 = vld [vmem:[#allocation8 + $0x7f8] sm:$0xff]
        %775 = vmatpush.msra.mxu0 %v639
        %776 = vmatpush.msra.mxu0 %v631
        %777 = vmatpush.msra.mxu0 %v623
        %778 = vmatpush.msra.mxu0 %v615
        %779 = vmatpush.msra.mxu0 %v607
        %780 = vmatpush.msra.mxu0 %v599
        %781 = vmatpush.msra.mxu0 %v591
        %782 = vmatpush.msra.mxu0 %v583
        %783 = vmatpush.msra.mxu0 %v575
        %784 = vmatpush.msra.mxu0 %v567
        %785 = vmatpush.msra.mxu0 %v559
        %786 = vmatpush.msra.mxu0 %v551
        %787 = vmatpush.msra.mxu0 %v543
        %788 = vmatpush.msra.mxu0 %v535
        %789 = vmatpush.msra.mxu0 %v527
        %790 = vmatpush.msra.mxu0 %v519
        %791 = vmatmul.f32.gmra.mxu0 %v517
        %v792 = vpop.f32.mrf.mxu0
        %v793 = vadd.f32 0.0, %v792
        %794 = vdwg.mxu0
        %795 = vmatpush.msra.mxu0 %v767
        %796 = vmatpush.msra.mxu0 %v759
        %797 = vmatpush.msra.mxu0 %v751
        %798 = vmatpush.msra.mxu0 %v743
        %799 = vmatpush.msra.mxu0 %v735
        %800 = vmatpush.msra.mxu0 %v727
        %801 = vmatpush.msra.mxu0 %v719
        %802 = vmatpush.msra.mxu0 %v711
        %803 = vmatpush.msra.mxu0 %v703
        %804 = vmatpush.msra.mxu0 %v695
        %805 = vmatpush.msra.mxu0 %v687
        %806 = vmatpush.msra.mxu0 %v679
        %807 = vmatpush.msra.mxu0 %v671
        %808 = vmatpush.msra.mxu0 %v663
        %809 = vmatpush.msra.mxu0 %v655
        %810 = vmatpush.msra.mxu0 %v647
        %811 = vmatmul.f32.gmra.mxu0 %v518
        %v812 = vpop.f32.mrf.mxu0
        %v813 = vadd.f32 %v793, %v812
        %814 = vdwg.mxu0
        %815 = vmatpush.msra.mxu0 %v640
        %816 = vmatpush.msra.mxu0 %v632
        %817 = vmatpush.msra.mxu0 %v624
        %818 = vmatpush.msra.mxu0 %v616
        %819 = vmatpush.msra.mxu0 %v608
        %820 = vmatpush.msra.mxu0 %v600
        %821 = vmatpush.msra.mxu0 %v592
        %822 = vmatpush.msra.mxu0 %v584
        %823 = vmatpush.msra.mxu0 %v576
        %824 = vmatpush.msra.mxu0 %v568
        %825 = vmatpush.msra.mxu0 %v560
        %826 = vmatpush.msra.mxu0 %v552
        %827 = vmatpush.msra.mxu0 %v544
        %828 = vmatpush.msra.mxu0 %v536
        %829 = vmatpush.msra.mxu0 %v528
        %830 = vmatpush.msra.mxu0 %v520
        %831 = vmatmul.f32.gmra.mxu0 %v517
        %v832 = vpop.f32.mrf.mxu0
        %v833 = vadd.f32 0.0, %v832
        %834 = vdwg.mxu0
        %835 = vmatpush.msra.mxu0 %v768
        %836 = vmatpush.msra.mxu0 %v760
        %837 = vmatpush.msra.mxu0 %v752
        %838 = vmatpush.msra.mxu0 %v744
        %839 = vmatpush.msra.mxu0 %v736
        %840 = vmatpush.msra.mxu0 %v728
        %841 = vmatpush.msra.mxu0 %v720
        %842 = vmatpush.msra.mxu0 %v712
        %843 = vmatpush.msra.mxu0 %v704
        %844 = vmatpush.msra.mxu0 %v696
        %845 = vmatpush.msra.mxu0 %v688
        %846 = vmatpush.msra.mxu0 %v680
        %847 = vmatpush.msra.mxu0 %v672
        %848 = vmatpush.msra.mxu0 %v664
        %849 = vmatpush.msra.mxu0 %v656
        %850 = vmatpush.msra.mxu0 %v648
        %851 = vmatmul.f32.gmra.mxu0 %v518
        %v852 = vpop.f32.mrf.mxu0
        %v853 = vadd.f32 %v833, %v852
        %854 = vdwg.mxu0
        %855 = vmatpush.msra.mxu0 %v641
        %856 = vmatpush.msra.mxu0 %v633
        %857 = vmatpush.msra.mxu0 %v625
        %858 = vmatpush.msra.mxu0 %v617
        %859 = vmatpush.msra.mxu0 %v609
        %860 = vmatpush.msra.mxu0 %v601
        %861 = vmatpush.msra.mxu0 %v593
        %862 = vmatpush.msra.mxu0 %v585
        %863 = vmatpush.msra.mxu0 %v577
        %864 = vmatpush.msra.mxu0 %v569
        %865 = vmatpush.msra.mxu0 %v561
        %866 = vmatpush.msra.mxu0 %v553
        %867 = vmatpush.msra.mxu0 %v545
        %868 = vmatpush.msra.mxu0 %v537
        %869 = vmatpush.msra.mxu0 %v529
        %870 = vmatpush.msra.mxu0 %v521
        %871 = vmatmul.f32.gmra.mxu0 %v517
        %v872 = vpop.f32.mrf.mxu0
        %v873 = vadd.f32 0.0, %v872
        %874 = vdwg.mxu0
        %875 = vmatpush.msra.mxu0 %v769
        %876 = vmatpush.msra.mxu0 %v761
        %877 = vmatpush.msra.mxu0 %v753
        %878 = vmatpush.msra.mxu0 %v745
        %879 = vmatpush.msra.mxu0 %v737
        %880 = vmatpush.msra.mxu0 %v729
        %881 = vmatpush.msra.mxu0 %v721
        %882 = vmatpush.msra.mxu0 %v713
        %883 = vmatpush.msra.mxu0 %v705
        %884 = vmatpush.msra.mxu0 %v697
        %885 = vmatpush.msra.mxu0 %v689
        %886 = vmatpush.msra.mxu0 %v681
        %887 = vmatpush.msra.mxu0 %v673
        %888 = vmatpush.msra.mxu0 %v665
        %889 = vmatpush.msra.mxu0 %v657
        %890 = vmatpush.msra.mxu0 %v649
        %891 = vmatmul.f32.gmra.mxu0 %v518
        %v892 = vpop.f32.mrf.mxu0
        %v893 = vadd.f32 %v873, %v892
        %894 = vdwg.mxu0
        %895 = vmatpush.msra.mxu0 %v642
        %896 = vmatpush.msra.mxu0 %v634
        %897 = vmatpush.msra.mxu0 %v626
        %898 = vmatpush.msra.mxu0 %v618
        %899 = vmatpush.msra.mxu0 %v610
        %900 = vmatpush.msra.mxu0 %v602
        %901 = vmatpush.msra.mxu0 %v594
        %902 = vmatpush.msra.mxu0 %v586
        %903 = vmatpush.msra.mxu0 %v578
        %904 = vmatpush.msra.mxu0 %v570
        %905 = vmatpush.msra.mxu0 %v562
        %906 = vmatpush.msra.mxu0 %v554
        %907 = vmatpush.msra.mxu0 %v546
        %908 = vmatpush.msra.mxu0 %v538
        %909 = vmatpush.msra.mxu0 %v530
        %910 = vmatpush.msra.mxu0 %v522
        %911 = vmatmul.f32.gmra.mxu0 %v517
        %v912 = vpop.f32.mrf.mxu0
        %v913 = vadd.f32 0.0, %v912
        %914 = vdwg.mxu0
        %915 = vmatpush.msra.mxu0 %v770
        %916 = vmatpush.msra.mxu0 %v762
        %917 = vmatpush.msra.mxu0 %v754
        %918 = vmatpush.msra.mxu0 %v746
        %919 = vmatpush.msra.mxu0 %v738
        %920 = vmatpush.msra.mxu0 %v730
        %921 = vmatpush.msra.mxu0 %v722
        %922 = vmatpush.msra.mxu0 %v714
        %923 = vmatpush.msra.mxu0 %v706
        %924 = vmatpush.msra.mxu0 %v698
        %925 = vmatpush.msra.mxu0 %v690
        %926 = vmatpush.msra.mxu0 %v682
        %927 = vmatpush.msra.mxu0 %v674
        %928 = vmatpush.msra.mxu0 %v666
        %929 = vmatpush.msra.mxu0 %v658
        %930 = vmatpush.msra.mxu0 %v650
        %931 = vmatmul.f32.gmra.mxu0 %v518
        %v932 = vpop.f32.mrf.mxu0
        %v933 = vadd.f32 %v913, %v932
        %934 = vdwg.mxu0
        %935 = vmatpush.msra.mxu0 %v643
        %936 = vmatpush.msra.mxu0 %v635
        %937 = vmatpush.msra.mxu0 %v627
        %938 = vmatpush.msra.mxu0 %v619
        %939 = vmatpush.msra.mxu0 %v611
        %940 = vmatpush.msra.mxu0 %v603
        %941 = vmatpush.msra.mxu0 %v595
        %942 = vmatpush.msra.mxu0 %v587
        %943 = vmatpush.msra.mxu0 %v579
        %944 = vmatpush.msra.mxu0 %v571
        %945 = vmatpush.msra.mxu0 %v563
        %946 = vmatpush.msra.mxu0 %v555
        %947 = vmatpush.msra.mxu0 %v547
        %948 = vmatpush.msra.mxu0 %v539
        %949 = vmatpush.msra.mxu0 %v531
        %950 = vmatpush.msra.mxu0 %v523
        %951 = vmatmul.f32.gmra.mxu0 %v517
        %v952 = vpop.f32.mrf.mxu0
        %v953 = vadd.f32 0.0, %v952
        %954 = vdwg.mxu0
        %955 = vmatpush.msra.mxu0 %v771
        %956 = vmatpush.msra.mxu0 %v763
        %957 = vmatpush.msra.mxu0 %v755
        %958 = vmatpush.msra.mxu0 %v747
        %959 = vmatpush.msra.mxu0 %v739
        %960 = vmatpush.msra.mxu0 %v731
        %961 = vmatpush.msra.mxu0 %v723
        %962 = vmatpush.msra.mxu0 %v715
        %963 = vmatpush.msra.mxu0 %v707
        %964 = vmatpush.msra.mxu0 %v699
        %965 = vmatpush.msra.mxu0 %v691
        %966 = vmatpush.msra.mxu0 %v683
        %967 = vmatpush.msra.mxu0 %v675
        %968 = vmatpush.msra.mxu0 %v667
        %969 = vmatpush.msra.mxu0 %v659
        %970 = vmatpush.msra.mxu0 %v651
        %971 = vmatmul.f32.gmra.mxu0 %v518
        %v972 = vpop.f32.mrf.mxu0
        %v973 = vadd.f32 %v953, %v972
        %974 = vdwg.mxu0
        %975 = vmatpush.msra.mxu0 %v644
        %976 = vmatpush.msra.mxu0 %v636
        %977 = vmatpush.msra.mxu0 %v628
        %978 = vmatpush.msra.mxu0 %v620
        %979 = vmatpush.msra.mxu0 %v612
        %980 = vmatpush.msra.mxu0 %v604
        %981 = vmatpush.msra.mxu0 %v596
        %982 = vmatpush.msra.mxu0 %v588
        %983 = vmatpush.msra.mxu0 %v580
        %984 = vmatpush.msra.mxu0 %v572
        %985 = vmatpush.msra.mxu0 %v564
        %986 = vmatpush.msra.mxu0 %v556
        %987 = vmatpush.msra.mxu0 %v548
        %988 = vmatpush.msra.mxu0 %v540
        %989 = vmatpush.msra.mxu0 %v532
        %990 = vmatpush.msra.mxu0 %v524
        %991 = vmatmul.f32.gmra.mxu0 %v517
        %v992 = vpop.f32.mrf.mxu0
        %v993 = vadd.f32 0.0, %v992
        %994 = vdwg.mxu0
        %995 = vmatpush.msra.mxu0 %v772
        %996 = vmatpush.msra.mxu0 %v764
        %997 = vmatpush.msra.mxu0 %v756
        %998 = vmatpush.msra.mxu0 %v748
        %999 = vmatpush.msra.mxu0 %v740
        %1000 = vmatpush.msra.mxu0 %v732
        %1001 = vmatpush.msra.mxu0 %v724
        %1002 = vmatpush.msra.mxu0 %v716
        %1003 = vmatpush.msra.mxu0 %v708
        %1004 = vmatpush.msra.mxu0 %v700
        %1005 = vmatpush.msra.mxu0 %v692
        %1006 = vmatpush.msra.mxu0 %v684
        %1007 = vmatpush.msra.mxu0 %v676
        %1008 = vmatpush.msra.mxu0 %v668
        %1009 = vmatpush.msra.mxu0 %v660
        %1010 = vmatpush.msra.mxu0 %v652
        %1011 = vmatmul.f32.gmra.mxu0 %v518
        %v1012 = vpop.f32.mrf.mxu0
        %v1013 = vadd.f32 %v993, %v1012
        %1014 = vdwg.mxu0
        %1015 = vmatpush.msra.mxu0 %v645
        %1016 = vmatpush.msra.mxu0 %v637
        %1017 = vmatpush.msra.mxu0 %v629
        %1018 = vmatpush.msra.mxu0 %v621
        %1019 = vmatpush.msra.mxu0 %v613
        %1020 = vmatpush.msra.mxu0 %v605
        %1021 = vmatpush.msra.mxu0 %v597
        %1022 = vmatpush.msra.mxu0 %v589
        %1023 = vmatpush.msra.mxu0 %v581
        %1024 = vmatpush.msra.mxu0 %v573
        %1025 = vmatpush.msra.mxu0 %v565
        %1026 = vmatpush.msra.mxu0 %v557
        %1027 = vmatpush.msra.mxu0 %v549
        %1028 = vmatpush.msra.mxu0 %v541
        %1029 = vmatpush.msra.mxu0 %v533
        %1030 = vmatpush.msra.mxu0 %v525
        %1031 = vmatmul.f32.gmra.mxu0 %v517
        %v1032 = vpop.f32.mrf.mxu0
        %v1033 = vadd.f32 0.0, %v1032
        %1034 = vdwg.mxu0
        %1035 = vmatpush.msra.mxu0 %v773
        %1036 = vmatpush.msra.mxu0 %v765
        %1037 = vmatpush.msra.mxu0 %v757
        %1038 = vmatpush.msra.mxu0 %v749
        %1039 = vmatpush.msra.mxu0 %v741
        %1040 = vmatpush.msra.mxu0 %v733
        %1041 = vmatpush.msra.mxu0 %v725
        %1042 = vmatpush.msra.mxu0 %v717
        %1043 = vmatpush.msra.mxu0 %v709
        %1044 = vmatpush.msra.mxu0 %v701
        %1045 = vmatpush.msra.mxu0 %v693
        %1046 = vmatpush.msra.mxu0 %v685
        %1047 = vmatpush.msra.mxu0 %v677
        %1048 = vmatpush.msra.mxu0 %v669
        %1049 = vmatpush.msra.mxu0 %v661
        %1050 = vmatpush.msra.mxu0 %v653
        %1051 = vmatmul.f32.gmra.mxu0 %v518
        %v1052 = vpop.f32.mrf.mxu0
        %v1053 = vadd.f32 %v1033, %v1052
        %1054 = vdwg.mxu0
        %1055 = vmatpush.msra.mxu0 %v646
        %1056 = vmatpush.msra.mxu0 %v638
        %1057 = vmatpush.msra.mxu0 %v630
        %1058 = vmatpush.msra.mxu0 %v622
        %1059 = vmatpush.msra.mxu0 %v614
        %1060 = vmatpush.msra.mxu0 %v606
        %1061 = vmatpush.msra.mxu0 %v598
        %1062 = vmatpush.msra.mxu0 %v590
        %1063 = vmatpush.msra.mxu0 %v582
        %1064 = vmatpush.msra.mxu0 %v574
        %1065 = vmatpush.msra.mxu0 %v566
        %1066 = vmatpush.msra.mxu0 %v558
        %1067 = vmatpush.msra.mxu0 %v550
        %1068 = vmatpush.msra.mxu0 %v542
        %1069 = vmatpush.msra.mxu0 %v534
        %1070 = vmatpush.msra.mxu0 %v526
        %1071 = vmatmul.f32.gmra.mxu0 %v517
        %v1072 = vpop.f32.mrf.mxu0
        %v1073 = vadd.f32 0.0, %v1072
        %1074 = vdwg.mxu0
        %1075 = vmatpush.msra.mxu0 %v774
        %1076 = vmatpush.msra.mxu0 %v766
        %1077 = vmatpush.msra.mxu0 %v758
        %1078 = vmatpush.msra.mxu0 %v750
        %1079 = vmatpush.msra.mxu0 %v742
        %1080 = vmatpush.msra.mxu0 %v734
        %1081 = vmatpush.msra.mxu0 %v726
        %1082 = vmatpush.msra.mxu0 %v718
        %1083 = vmatpush.msra.mxu0 %v710
        %1084 = vmatpush.msra.mxu0 %v702
        %1085 = vmatpush.msra.mxu0 %v694
        %1086 = vmatpush.msra.mxu0 %v686
        %1087 = vmatpush.msra.mxu0 %v678
        %1088 = vmatpush.msra.mxu0 %v670
        %1089 = vmatpush.msra.mxu0 %v662
        %1090 = vmatpush.msra.mxu0 %v654
        %1091 = vmatmul.f32.gmra.mxu0 %v518
        %v1092 = vpop.f32.mrf.mxu0
        %v1093 = vadd.f32 %v1073, %v1092
        %1094 = vdwg.mxu0
        %1095 = vst [vmem:[%s237] sm:$0xff] %v813
        %1096 = vst [vmem:[%s237 + $0x8] sm:$0xff] %v853
        %1097 = vst [vmem:[%s237 + $0x10] sm:$0xff] %v893
        %1098 = vst [vmem:[%s237 + $0x18] sm:$0xff] %v933
        %1099 = vst [vmem:[%s237 + $0x20] sm:$0xff] %v973
        %1100 = vst [vmem:[%s237 + $0x28] sm:$0xff] %v1013
        %1101 = vst [vmem:[%s237 + $0x30] sm:$0xff] %v1053
        %1102 = vst [vmem:[%s237 + $0x38] sm:$0xff] %v1093
        %s1103 = sand.u32 %s114, 1
        %s1104 = scalar_lea.sflag [#allocation5], %s1103
        %s1105 = sand.u32 %s114, 1
        %s1106 = smul.addr %s1105, 64
        %s1107 = scalar_lea.vmem [#allocation10], %s1106
        // Predicated region
        $region45: #{tpu_custom_call.1} parent=31 // pred_check
          %p1108 = pneg %p124
        $region46: #{tpu_custom_call.1} parent=31 // pred_check_branch
          %1110 = sbr.rel (%p1108) target = $region48
        $region47: #{tpu_custom_call.1} parent=31 // pred_region
          %s1111 = smul.u32 8, %s27
          %1113 = vsyncadd %s1104, 0
          %s1114 = smul.addr %s26, 8
          %s1115 = sadd.s32 %s1111, %s1114
          %s1116 = smul.addr %s1115, 8
          %s1117 = scalar_lea.hbm %s3, %s1116
          %s1119 = sshll.u32 %s1107, 4
          %s1120 = int_to_ptr.vmem [resolvable:$true] %s1119
          %s1121 = sshll.u32 %s1117, 4
          %s1122 = int_to_ptr.hbm [resolvable:$true] %s1121
          %1124 = dma.vmem_to_hbm [thread:$0]  %s1120, 1024, %s1122, %s1104
        $region48: #{tpu_custom_call.1} parent=31 // pred_fallthru
          _
      $region32: #{tpu_custom_call.1} parent=5 // pred_fallthru
        _
      %p1125 = scmp.le.s32.totalorder 2, %s17
      // Predicated region
      $region49: #{tpu_custom_call.1} parent=5 // pred_check
        %p1126 = pneg %p1125
      $region50: #{tpu_custom_call.1} parent=5 // pred_check_branch
        %1128 = sbr.rel (%p1126) target = $region52
      $region51: #{tpu_custom_call.1} parent=5 // pred_region
        %s1129 = ssub.s32 %s17, 2
        // Predicated region
        $region53: #{tpu_custom_call.1} parent=51 // pred_check
          %p1130 = pneg %p130
        $region54: #{tpu_custom_call.1} parent=51 // pred_check_branch
          %1132 = sbr.rel (%p1130) target = $region56
        $region55: #{tpu_custom_call.1} parent=51 // pred_region
          %s1133 = sand.u32 %s115, 1
          %s1134 = scalar_lea.sflag [#allocation5], %s1133
          %s1135 = sand.u32 %s115, 1
          %s1136 = smul.addr %s1135, 64
          %s1137 = scalar_lea.vmem [#allocation10], %s1136
          %1139 = dma.done %s1134, 1024
        $region56: #{tpu_custom_call.1} parent=51 // pred_fallthru
          _
      $region52: #{tpu_custom_call.1} parent=5 // pred_fallthru
        _
    $region6: #{tpu_custom_call.1} parent=1 // loop_footer
      %s21 = sadd.s32 1, %s17
    $region7: #{tpu_custom_call.1} parent=1 // loop_footer_branch
      %16 = sbr.rel target = $region3
    $region8: #{tpu_custom_call.1} parent=1 // loop_exit
      _
    %1140 = vsyncpa [#allocation4], 1
    %s1141 = scalar_lea.sflag [#allocation4], 1
    %1142 = vsyncpa %s1141, 1
    %1143 = vsyncpa [#allocation9], 1
    %1144 = vsyncpa [#allocation5], 1
    %s1145 = scalar_lea.sflag [#allocation5], 1
    %1146 = vsyncpa %s1145, 1
    %1147 = vsyncpa [#allocation6], 1
    %s1148 = scalar_lea.sflag [#allocation6], 1
    %1149 = vsyncpa %s1148, 1

</llo_original>
